<compile_context>
chip_gen: v6e
topology: v6e:2x2x1
jax: 0.10.0
libtpu: 0.0.40
codegen_flags: <defaults>
</compile_context>

<pallas_src>
import functools

import jax
import jax.numpy as jnp
from jax.experimental import pallas as pl
from jax.experimental.pallas import tpu as pltpu


def _round_up(v, m):
    return (v + m - 1) // m * m


def _cdiv(a, b):
    return (a + b - 1) // b


# ---------------------------------------------------------------------------
# Kernel 1: streaming pre-pool Linear+ReLU and scatter-sum(+count) pooling.
# grid = (2 phases, T steps).  Phase p handles global tile u = p*T + t of the
# virtual sequence [node tiles ++ edge tiles]; the phase axis is "parallel"
# (both TensorCores on v7x, plain sequential loop on v5e/v6e).
# ---------------------------------------------------------------------------
def _stream_pool_kernel(nseg_ref, eseg_ref, x_ref, e_ref,
                        wx_ref, bx_ref, we_ref, be_ref,
                        acc_ref, *,
                        tile_rows, half_steps, n_node_tiles, n_nodes, n_edges):
    p = pl.program_id(0)
    t = pl.program_id(1)
    u = p * half_steps + t                         # global tile index
    gp = acc_ref.shape[2]

    @pl.when(t == 0)
    def _init():
        acc_ref[...] = jnp.zeros_like(acc_ref)

    def _accumulate(rows, seg, w_ref, b_ref, stream, row_base, n_valid):
        tr = rows.shape[0]
        # Row validity for ragged tails / overflow steps (n_valid is static).
        valid_col = (jax.lax.broadcasted_iota(jnp.int32, (tr, 1), 0)
                     + row_base) < n_valid                        # [TR, 1]
        valid_row = (jax.lax.broadcasted_iota(jnp.int32, (1, tr), 1)
                     + row_base) < n_valid                        # [1, TR]
        # Zero out-of-range rows so stale VMEM garbage (possibly inf/NaN)
        # cannot leak through 0 * inf = NaN in the pooling matmul.
        rows = jnp.where(valid_col, rows, jnp.zeros_like(rows))
        # Pre-pool Linear + ReLU.  The weights carry one extra all-zero output
        # column whose bias is 1, so column H of `h` is a per-row count
        # feature and the pooling matmul below produces sums and counts in a
        # single MXU op.
        h = jnp.dot(rows, w_ref[...],
                    preferred_element_type=jnp.float32) + b_ref[...]
        h = jnp.maximum(h, 0.0)                                   # [TR, H+1]
        # One-hot graph membership (built in-VMEM), masked by row validity.
        onehot = jnp.logical_and(
            jax.lax.broadcasted_iota(jnp.int32, (gp, tr), 0) == seg,
            valid_row).astype(jnp.float32)                        # [Gp, TR]
        cur = acc_ref[0, stream]
        acc_ref[0, stream] = cur + jnp.dot(
            onehot, h, preferred_element_type=jnp.float32)

    @pl.when(u < n_node_tiles)
    def _node_step():
        _accumulate(x_ref[...], nseg_ref[...], wx_ref, bx_ref, 0,
                    u * tile_rows, n_nodes)

    @pl.when(u >= n_node_tiles)
    def _edge_step():
        _accumulate(e_ref[...], eseg_ref[...], we_ref, be_ref, 1,
                    (u - n_node_tiles) * tile_rows, n_edges)


# ---------------------------------------------------------------------------
# Kernel 2 (grid-less, tiny): mean -> LN(2H) -> Linear -> ReLU -> LN(H) -> Linear.
# ---------------------------------------------------------------------------
def _finalize_kernel(acc_ref, ln1gx_ref, ln1bx_ref, ln1ge_ref, ln1be_ref,
                     w1x_ref, w1e_ref, b1_ref, ln2g_ref, ln2b_ref,
                     w2_ref, b2_ref, o_ref):
    h_dim = w1x_ref.shape[0]
    accx = acc_ref[0, 0] + acc_ref[1, 0]           # [Gp, H+1] (sum | count)
    acce = acc_ref[0, 1] + acc_ref[1, 1]
    gx = accx[:, :h_dim] / jnp.maximum(accx[:, h_dim:h_dim + 1], 1.0)
    ge = acce[:, :h_dim] / jnp.maximum(acce[:, h_dim:h_dim + 1], 1.0)

    # LayerNorm(2H) over the virtual concat [gx | ge] (concat-free).
    two_h = 2.0 * h_dim
    mu = (jnp.sum(gx, axis=-1, keepdims=True)
          + jnp.sum(ge, axis=-1, keepdims=True)) / two_h
    dx, de = gx - mu, ge - mu
    var = (jnp.sum(dx * dx, axis=-1, keepdims=True)
           + jnp.sum(de * de, axis=-1, keepdims=True)) / two_h
    inv = jax.lax.rsqrt(var + 1e-5)
    nx = dx * inv * ln1gx_ref[...] + ln1bx_ref[...]
    ne = de * inv * ln1ge_ref[...] + ln1be_ref[...]

    # Linear(2H, H) as two partial matmuls, then ReLU.
    h = (jnp.dot(nx, w1x_ref[...], preferred_element_type=jnp.float32)
         + jnp.dot(ne, w1e_ref[...], preferred_element_type=jnp.float32)
         + b1_ref[...])
    h = jnp.maximum(h, 0.0)

    # LayerNorm(H).
    mu2 = jnp.mean(h, axis=-1, keepdims=True)
    d2 = h - mu2
    var2 = jnp.mean(d2 * d2, axis=-1, keepdims=True)
    h = d2 * jax.lax.rsqrt(var2 + 1e-5) * ln2g_ref[...] + ln2b_ref[...]

    # Final Linear(H, out_pad) -> lane-dense store (sliced in the wrapper).
    o_ref[...] = (jnp.dot(h, w2_ref[...], preferred_element_type=jnp.float32)
                  + b2_ref[...])


# ---------------------------------------------------------------------------
# Wrapper
# ---------------------------------------------------------------------------
def ds_node_edge_readout(params, x, edge_index, edge_attr, batch, num_graphs,
                         tile_rows=512):
    """DSNodeEdgeReadout forward (reduce='mean', num_layers=2).

    Rows stream in the dtype of `x`/`edge_attr` (pass bf16 to halve HBM traffic);
    all accumulation and MLP math stays f32.  `num_graphs`/`tile_rows` are static.
    """
    assert tile_rows % 128 == 0
    N, in_dim = x.shape
    E = edge_attr.shape[0]
    H = params["wx"].shape[1]
    out_dim = params["w2"].shape[1]
    row_dtype = x.dtype

    TR = tile_rows
    Gp = _round_up(max(int(num_graphs), 1), 8)     # sublane-pad graphs
    Haug = H + 1                                   # hidden + count channel
    OUTp = _round_up(out_dim, 128)                 # lane-dense final output

    # Row streams: no HBM round trip.  Only arrays smaller than one tile
    # (incl. N==0 / E==0) are padded up to a single tile; larger arrays are
    # passed as-is and the ragged last tile is masked inside the kernel.
    def _prep_rows(rows, seg):
        n = rows.shape[0]
        if n < TR:
            rows = jnp.zeros((TR, in_dim), row_dtype).at[:n].set(
                rows.astype(row_dtype))
            seg = jnp.full((TR,), -1, jnp.int32).at[:n].set(
                seg.astype(jnp.int32))
        else:
            rows = rows.astype(row_dtype)
            seg = seg.astype(jnp.int32)
        return rows, seg.reshape(1, -1), n

    x_rows, nseg, n_nodes = _prep_rows(x, batch)
    edge_batch = batch[edge_index[0]]              # tiny gather, kept in XLA
    e_rows, eseg, n_edges = _prep_rows(edge_attr, edge_batch)

    nt_node = _cdiv(x_rows.shape[0], TR)
    nt_edge = _cdiv(e_rows.shape[0], TR)
    total_tiles = nt_node + nt_edge
    T = _cdiv(total_tiles, 2)                      # balanced halves per phase

    # Pre-pool weights [in, H] -> [in, H+1]: zero column + bias 1 => count channel.
    def _aug(w, b):
        w_aug = jnp.concatenate(
            [w.astype(jnp.float32), jnp.zeros((in_dim, 1), jnp.float32)], axis=1)
        b_aug = jnp.concatenate(
            [b.astype(jnp.float32), jnp.ones((1, 1), jnp.float32)], axis=1)
        return w_aug.astype(row_dtype), b_aug

    wx_aug, bx_aug = _aug(params["wx"], params["bx"])
    we_aug, be_aug = _aug(params["we"], params["be"])

    # ---- index maps: phase p handles global tile u = p*T + t; inactive
    # streams stay pinned (clipped index) so they are never re-DMA'd.
    def _u(p, t):
        return p * T + t

    def node_seg_map(p, t):
        return (0, jnp.minimum(_u(p, t), nt_node - 1))

    def edge_seg_map(p, t):
        return (0, jnp.clip(_u(p, t) - nt_node, 0, nt_edge - 1))

    def node_row_map(p, t):
        return (jnp.minimum(_u(p, t), nt_node - 1), 0)

    def edge_row_map(p, t):
        return (jnp.clip(_u(p, t) - nt_node, 0, nt_edge - 1), 0)

    def const_map(p, t):
        return (0, 0)

    # ---- explicit VMEM budget (double-buffered blocks, 128-lane padding).
    def _blk_bytes(shape, dtype):
        lead = 1
        for s in shape[:-2]:
            lead *= s
        r = shape[-2] if len(shape) >= 2 else 1
        return (lead * _round_up(r, 8) * _round_up(shape[-1], 128)
                * jnp.dtype(dtype).itemsize)

    est = (2 * 2 * _blk_bytes((TR, in_dim), row_dtype)       # x & e row tiles
           + 2 * 2 * _blk_bytes((1, TR), jnp.int32)          # seg tiles
           + 2 * 2 * (_blk_bytes(wx_aug.shape, row_dtype)
                      + _blk_bytes(bx_aug.shape, jnp.float32))
           + 2 * _blk_bytes((1, 2, Gp, Haug), jnp.float32))
    vmem_limit = int(min(max(2 * est, 32 * 1024 * 1024), 48 * 1024 * 1024))

    stream_kernel = functools.partial(
        _stream_pool_kernel, tile_rows=TR, half_steps=T,
        n_node_tiles=nt_node, n_nodes=n_nodes, n_edges=n_edges)

    acc = pl.pallas_call(
        stream_kernel,
        out_shape=jax.ShapeDtypeStruct((2, 2, Gp, Haug), jnp.float32),
        grid=(2, T),
        in_specs=[
            pl.BlockSpec((1, TR), node_seg_map),
            pl.BlockSpec((1, TR), edge_seg_map),
            pl.BlockSpec((TR, in_dim), node_row_map),
            pl.BlockSpec((TR, in_dim), edge_row_map),
            pl.BlockSpec(wx_aug.shape, const_map),
            pl.BlockSpec(bx_aug.shape, const_map),
            pl.BlockSpec(we_aug.shape, const_map),
            pl.BlockSpec(be_aug.shape, const_map),
        ],
        out_specs=pl.BlockSpec((1, 2, Gp, Haug), lambda p, t: (p, 0, 0, 0)),
        compiler_params=pltpu.CompilerParams(
            dimension_semantics=("parallel", "arbitrary"),
            vmem_limit_bytes=vmem_limit),
    )(nseg, eseg, x_rows, e_rows, wx_aug, bx_aug, we_aug, be_aug)

    # Post-pool params: split LN(2H)/Linear(2H,H) into node/edge halves, pad
    # the final projection to 128 lanes.
    ln1gx, ln1ge = params["ln1_g"][:, :H], params["ln1_g"][:, H:]
    ln1bx, ln1be = params["ln1_b"][:, :H], params["ln1_b"][:, H:]
    w1x, w1e = params["w1"][:H], params["w1"][H:]
    w2p = jnp.zeros((H, OUTp), jnp.float32).at[:, :out_dim].set(params["w2"])
    b2p = jnp.zeros((1, OUTp), jnp.float32).at[:, :out_dim].set(params["b2"])

    out = pl.pallas_call(
        _finalize_kernel,
        out_shape=jax.ShapeDtypeStruct((Gp, OUTp), jnp.float32),
    )(acc, ln1gx, ln1bx, ln1ge, ln1be, w1x, w1e, params["b1"],
      params["ln2_g"], params["ln2_b"], w2p, b2p)

    return out[:num_graphs, :out_dim]


# ---------------------------------------------------------------------------
# Pure-JAX reference.
# ---------------------------------------------------------------------------
def _reference(params, x, edge_index, edge_attr, batch, num_graphs):
    def ln(v, g, b):
        mu = jnp.mean(v, axis=-1, keepdims=True)
        var = jnp.mean((v - mu) ** 2, axis=-1, keepdims=True)
        return (v - mu) / jnp.sqrt(var + 1e-5) * g + b

    x_h = jax.nn.relu(x @ params["wx"] + params["bx"])
    e_h = jax.nn.relu(edge_attr @ params["we"] + params["be"])
    cnt_n = jnp.maximum(jax.ops.segment_sum(jnp.ones_like(batch, jnp.float32),
                                            batch, num_graphs), 1.0)
    gx = jax.ops.segment_sum(x_h, batch, num_graphs) / cnt_n[:, None]
    eb = batch[edge_index[0]]
    cnt_e = jnp.maximum(jax.ops.segment_sum(jnp.ones_like(eb, jnp.float32),
                                            eb, num_graphs), 1.0)
    ge = jax.ops.segment_sum(e_h, eb, num_graphs) / cnt_e[:, None]
    g = jnp.concatenate([gx, ge], axis=-1)
    h = ln(g, params["ln1_g"], params["ln1_b"])
    h = jax.nn.relu(h @ params["w1"] + params["b1"])
    h = ln(h, params["ln2_g"], params["ln2_b"])
    return h @ params["w2"] + params["b2"]


# ---------------------------------------------------------------------------
# Deterministic parameter init + example.
# ---------------------------------------------------------------------------
def init_params(key, in_dim, hidden_dim, out_dim):
    ks = jax.random.split(key, 8)
    s_in = 1.0 / jnp.sqrt(in_dim)
    s_2h = 1.0 / jnp.sqrt(2 * hidden_dim)
    s_h = 1.0 / jnp.sqrt(hidden_dim)
    return {
        "wx": jax.random.uniform(ks[0], (in_dim, hidden_dim), jnp.float32, -s_in, s_in),
        "bx": jax.random.uniform(ks[1], (1, hidden_dim), jnp.float32, -s_in, s_in),
        "we": jax.random.uniform(ks[2], (in_dim, hidden_dim), jnp.float32, -s_in, s_in),
        "be": jax.random.uniform(ks[3], (1, hidden_dim), jnp.float32, -s_in, s_in),
        "ln1_g": jnp.ones((1, 2 * hidden_dim), jnp.float32),
        "ln1_b": jnp.zeros((1, 2 * hidden_dim), jnp.float32),
        "w1": jax.random.uniform(ks[4], (2 * hidden_dim, hidden_dim), jnp.float32, -s_2h, s_2h),
        "b1": jax.random.uniform(ks[5], (1, hidden_dim), jnp.float32, -s_2h, s_2h),
        "ln2_g": jnp.ones((1, hidden_dim), jnp.float32),
        "ln2_b": jnp.zeros((1, hidden_dim), jnp.float32),
        "w2": jax.random.uniform(ks[6], (hidden_dim, out_dim), jnp.float32, -s_h, s_h),
        "b2": jax.random.uniform(ks[7], (1, out_dim), jnp.float32, -s_h, s_h),
    }


if __name__ == "__main__":
    in_dim, hidden_dim, out_dim = 16, 32, 8
    N, E, G = 300, 452, 5
    TILE = 128   # small tiles for the small demo shapes (production default: 512)

    key = jax.random.PRNGKey(0)
    kp, kx, ke, kb, ki = jax.random.split(key, 5)

    params = init_params(kp, in_dim, hidden_dim, out_dim)
    x = jax.random.normal(kx, (N, in_dim), jnp.float32)
    edge_attr = jax.random.normal(ke, (E, in_dim), jnp.float32)
    batch = jax.random.randint(kb, (N,), 0, G, jnp.int32)
    edge_index = jax.random.randint(ki, (2, E), 0, N, jnp.int32)

    fwd = jax.jit(functools.partial(ds_node_edge_readout,
                                    num_graphs=G, tile_rows=TILE))

    # --- f32 run: exact module semantics ---
    out = jax.block_until_ready(fwd(params, x, edge_index, edge_attr, batch))
    ref = _reference(params, x, edge_index, edge_attr, batch, G)
    assert out.shape == (G, out_dim), out.shape
    assert jnp.allclose(out, ref, atol=1e-3, rtol=1e-3)

    # --- bf16-streamed run: halves HBM traffic of the dominant row streams ---
    x_bf = x.astype(jnp.bfloat16)
    e_bf = edge_attr.astype(jnp.bfloat16)
    out_bf = jax.block_until_ready(fwd(params, x_bf, edge_index, e_bf, batch))
    params_r = dict(params)
    params_r["wx"] = params["wx"].astype(jnp.bfloat16).astype(jnp.float32)
    params_r["we"] = params["we"].astype(jnp.bfloat16).astype(jnp.float32)
    ref_bf = _reference(params_r, x_bf.astype(jnp.float32), edge_index,
                        e_bf.astype(jnp.float32), batch, G)
    assert out_bf.shape == (G, out_dim), out_bf.shape
    assert jnp.allclose(out_bf, ref_bf, atol=5e-3, rtol=5e-3)

    print("KERNEL_OK")
</pallas_src>

<mosaic_0001>
module attributes {stable_mosaic.version = 11 : i64} {
  func.func @_stream_pool_kernel(%arg0: i32, %arg1: i32, %arg2: memref<1x128xi32, #tpu.memory_space<vmem>>, %arg3: memref<1x128xi32, #tpu.memory_space<vmem>>, %arg4: memref<128x16xf32, #tpu.memory_space<vmem>>, %arg5: memref<128x16xf32, #tpu.memory_space<vmem>>, %arg6: memref<16x33xf32, #tpu.memory_space<vmem>>, %arg7: memref<1x33xf32, #tpu.memory_space<vmem>>, %arg8: memref<16x33xf32, #tpu.memory_space<vmem>>, %arg9: memref<1x33xf32, #tpu.memory_space<vmem>>, %arg10: memref<1x2x8x33xf32, #tpu.memory_space<vmem>>) attributes {dimension_semantics = [#tpu.dimension_semantics<parallel>, #tpu.dimension_semantics<arbitrary>], iteration_bounds = array<i64: 2, 4>, scalar_prefetch = 0 : i64, scratch_operands = 0 : i64, tpu.core_type = #tpu.core_type<tc>, window_params = [{transform_indices = @transform_0, window_bounds = array<i64: 1, 128>}, {transform_indices = @transform_1, window_bounds = array<i64: 1, 128>}, {transform_indices = @transform_2, window_bounds = array<i64: 128, 16>}, {transform_indices = @transform_3, window_bounds = array<i64: 128, 16>}, {pipeline_mode = #tpu.pipeline_mode<synchronous>, transform_indices = @transform_4, window_bounds = array<i64: 16, 33>}, {pipeline_mode = #tpu.pipeline_mode<synchronous>, transform_indices = @transform_5, window_bounds = array<i64: 1, 33>}, {pipeline_mode = #tpu.pipeline_mode<synchronous>, transform_indices = @transform_6, window_bounds = array<i64: 16, 33>}, {pipeline_mode = #tpu.pipeline_mode<synchronous>, transform_indices = @transform_7, window_bounds = array<i64: 1, 33>}, {transform_indices = @transform_8, window_bounds = array<i64: 1, 2, 8, 33>}]} {
    %c4_i32 = arith.constant 4 : i32
    %0 = arith.muli %arg0, %c4_i32 : i32
    %1 = arith.addi %0, %arg1 : i32
    %c0_i32 = arith.constant 0 : i32
    %2 = arith.cmpi eq, %arg1, %c0_i32 : i32
    %3 = arith.extui %2 : i1 to i32
    %c0_i32_0 = arith.constant 0 : i32
    %4 = arith.cmpi ne, %3, %c0_i32_0 : i32
    scf.if %4 {
      %cst = arith.constant 0.000000e+00 : f32
      %11 = vector.broadcast %cst : f32 to vector<1x2x8x33xf32>
      %c0 = arith.constant 0 : index
      %c0_4 = arith.constant 0 : index
      %c0_5 = arith.constant 0 : index
      %c0_6 = arith.constant 0 : index
      %12 = vector.load %arg10[%c0, %c0_4, %c0_5, %c0_6] : memref<1x2x8x33xf32, #tpu.memory_space<vmem>>, vector<1x2x8x33xf32>
      tpu.vector_store %arg10[%c0, %c0_4, %c0_5, %c0_6], %11 {strides = array<i32>} : memref<1x2x8x33xf32, #tpu.memory_space<vmem>>, vector<1x2x8x33xf32>,
    } else {
    }
    %c3_i32 = arith.constant 3 : i32
    %5 = arith.cmpi slt, %1, %c3_i32 : i32
    %6 = arith.extui %5 : i1 to i32
    %c0_i32_1 = arith.constant 0 : i32
    %7 = arith.cmpi ne, %6, %c0_i32_1 : i32
    scf.if %7 {
      %c0 = arith.constant 0 : index
      %c0_4 = arith.constant 0 : index
      %11 = vector.load %arg4[%c0, %c0_4] : memref<128x16xf32, #tpu.memory_space<vmem>>, vector<128x16xf32>
      %c0_5 = arith.constant 0 : index
      %c0_6 = arith.constant 0 : index
      %12 = vector.load %arg2[%c0_5, %c0_6] : memref<1x128xi32, #tpu.memory_space<vmem>>, vector<1x128xi32>
      %c128_i32 = arith.constant 128 : i32
      %13 = arith.muli %1, %c128_i32 : i32
      %14 = tpu.iota {dimensions = array<i32: 0>} : vector<128x1xi32>
      %15 = vector.broadcast %13 : i32 to vector<128x1xi32>
      %16 = arith.addi %14, %15 : vector<128x1xi32>
      %c300_i32 = arith.constant 300 : i32
      %17 = vector.broadcast %c300_i32 : i32 to vector<128x1xi32>
      %18 = arith.cmpi slt, %16, %17 : vector<128x1xi32>
      %19 = tpu.iota {dimensions = array<i32: 1>} : vector<1x128xi32>
      %20 = vector.broadcast %13 : i32 to vector<1x128xi32>
      %21 = arith.addi %19, %20 : vector<1x128xi32>
      %c300_i32_7 = arith.constant 300 : i32
      %22 = vector.broadcast %c300_i32_7 : i32 to vector<1x128xi32>
      %23 = arith.cmpi slt, %21, %22 : vector<1x128xi32>
      %cst = arith.constant 0.000000e+00 : f32
      %24 = vector.broadcast %cst : f32 to vector<128x16xf32>
      %25 = vector.shape_cast %18 : vector<128x1xi1> to vector<128x1xi1>
      %26 = vector.broadcast %25 : vector<128x1xi1> to vector<128x16xi1>
      %27 = arith.select %26, %11, %24 : vector<128x16xi1>, vector<128x16xf32>
      %c0_8 = arith.constant 0 : index
      %c0_9 = arith.constant 0 : index
      %28 = vector.load %arg6[%c0_8, %c0_9] : memref<16x33xf32, #tpu.memory_space<vmem>>, vector<16x33xf32>
      %cst_10 = arith.constant dense<0.000000e+00> : vector<128x33xf32>
      %29 = tpu.matmul %27, %28, %cst_10 {dimension_numbers = #tpu.dot_dimension_numbers<[1], [0], [0], [1], [0, 0, 1, 1], [], []>} : vector<128x16xf32>, vector<16x33xf32>, vector<128x33xf32> -> vector<128x33xf32>
      %c0_11 = arith.constant 0 : index
      %c0_12 = arith.constant 0 : index
      %30 = vector.load %arg7[%c0_11, %c0_12] : memref<1x33xf32, #tpu.memory_space<vmem>>, vector<1x33xf32>
      %31 = vector.broadcast %30 : vector<1x33xf32> to vector<128x33xf32>
      %32 = arith.addf %29, %31 : vector<128x33xf32>
      %cst_13 = arith.constant 0.000000e+00 : f32
      %33 = vector.broadcast %cst_13 : f32 to vector<128x33xf32>
      %34 = arith.maximumf %32, %33 : vector<128x33xf32>
      %35 = tpu.iota {dimensions = array<i32: 0>} : vector<8x128xi32>
      %36 = vector.broadcast %12 : vector<1x128xi32> to vector<8x128xi32>
      %37 = arith.cmpi eq, %35, %36 : vector<8x128xi32>
      %38 = vector.broadcast %23 : vector<1x128xi1> to vector<8x128xi1>
      %39 = arith.andi %37, %38 : vector<8x128xi1>
      %40 = arith.extui %39 : vector<8x128xi1> to vector<8x128xi32>
      %41 = arith.sitofp %40 : vector<8x128xi32> to vector<8x128xf32>
      %c0_14 = arith.constant 0 : index
      %c0_15 = arith.constant 0 : index
      %c0_16 = arith.constant 0 : index
      %c0_17 = arith.constant 0 : index
      %42 = vector.load %arg10[%c0_14, %c0_15, %c0_16, %c0_17] : memref<1x2x8x33xf32, #tpu.memory_space<vmem>>, vector<1x1x8x33xf32>
      %43 = vector.shape_cast %42 : vector<1x1x8x33xf32> to vector<8x33xf32>
      %cst_18 = arith.constant dense<0.000000e+00> : vector<8x33xf32>
      %44 = tpu.matmul %41, %34, %cst_18 {dimension_numbers = #tpu.dot_dimension_numbers<[1], [0], [0], [1], [0, 0, 1, 1], [], []>} : vector<8x128xf32>, vector<128x33xf32>, vector<8x33xf32> -> vector<8x33xf32>
      %45 = arith.addf %43, %44 : vector<8x33xf32>
      %c0_19 = arith.constant 0 : index
      %c0_20 = arith.constant 0 : index
      %c0_21 = arith.constant 0 : index
      %c0_22 = arith.constant 0 : index
      %46 = vector.load %arg10[%c0_19, %c0_20, %c0_21, %c0_22] : memref<1x2x8x33xf32, #tpu.memory_space<vmem>>, vector<1x1x8x33xf32>
      %47 = vector.shape_cast %46 : vector<1x1x8x33xf32> to vector<8x33xf32>
      %48 = vector.shape_cast %45 : vector<8x33xf32> to vector<1x1x8x33xf32>
      tpu.vector_store %arg10[%c0_19, %c0_20, %c0_21, %c0_22], %48 {strides = array<i32>} : memref<1x2x8x33xf32, #tpu.memory_space<vmem>>, vector<1x1x8x33xf32>,
    } else {
    }
    %c3_i32_2 = arith.constant 3 : i32
    %8 = arith.cmpi sge, %1, %c3_i32_2 : i32
    %9 = arith.extui %8 : i1 to i32
    %c0_i32_3 = arith.constant 0 : i32
    %10 = arith.cmpi ne, %9, %c0_i32_3 : i32
    scf.if %10 {
      %c0 = arith.constant 0 : index
      %c0_4 = arith.constant 0 : index
      %11 = vector.load %arg5[%c0, %c0_4] : memref<128x16xf32, #tpu.memory_space<vmem>>, vector<128x16xf32>
      %c0_5 = arith.constant 0 : index
      %c0_6 = arith.constant 0 : index
      %12 = vector.load %arg3[%c0_5, %c0_6] : memref<1x128xi32, #tpu.memory_space<vmem>>, vector<1x128xi32>
      %c3_i32_7 = arith.constant 3 : i32
      %13 = arith.subi %1, %c3_i32_7 : i32
      %c128_i32 = arith.constant 128 : i32
      %14 = arith.muli %13, %c128_i32 : i32
      %15 = tpu.iota {dimensions = array<i32: 0>} : vector<128x1xi32>
      %16 = vector.broadcast %14 : i32 to vector<128x1xi32>
      %17 = arith.addi %15, %16 : vector<128x1xi32>
      %c452_i32 = arith.constant 452 : i32
      %18 = vector.broadcast %c452_i32 : i32 to vector<128x1xi32>
      %19 = arith.cmpi slt, %17, %18 : vector<128x1xi32>
      %20 = tpu.iota {dimensions = array<i32: 1>} : vector<1x128xi32>
      %21 = vector.broadcast %14 : i32 to vector<1x128xi32>
      %22 = arith.addi %20, %21 : vector<1x128xi32>
      %c452_i32_8 = arith.constant 452 : i32
      %23 = vector.broadcast %c452_i32_8 : i32 to vector<1x128xi32>
      %24 = arith.cmpi slt, %22, %23 : vector<1x128xi32>
      %cst = arith.constant 0.000000e+00 : f32
      %25 = vector.broadcast %cst : f32 to vector<128x16xf32>
      %26 = vector.shape_cast %19 : vector<128x1xi1> to vector<128x1xi1>
      %27 = vector.broadcast %26 : vector<128x1xi1> to vector<128x16xi1>
      %28 = arith.select %27, %11, %25 : vector<128x16xi1>, vector<128x16xf32>
      %c0_9 = arith.constant 0 : index
      %c0_10 = arith.constant 0 : index
      %29 = vector.load %arg8[%c0_9, %c0_10] : memref<16x33xf32, #tpu.memory_space<vmem>>, vector<16x33xf32>
      %cst_11 = arith.constant dense<0.000000e+00> : vector<128x33xf32>
      %30 = tpu.matmul %28, %29, %cst_11 {dimension_numbers = #tpu.dot_dimension_numbers<[1], [0], [0], [1], [0, 0, 1, 1], [], []>} : vector<128x16xf32>, vector<16x33xf32>, vector<128x33xf32> -> vector<128x33xf32>
      %c0_12 = arith.constant 0 : index
      %c0_13 = arith.constant 0 : index
      %31 = vector.load %arg9[%c0_12, %c0_13] : memref<1x33xf32, #tpu.memory_space<vmem>>, vector<1x33xf32>
      %32 = vector.broadcast %31 : vector<1x33xf32> to vector<128x33xf32>
      %33 = arith.addf %30, %32 : vector<128x33xf32>
      %cst_14 = arith.constant 0.000000e+00 : f32
      %34 = vector.broadcast %cst_14 : f32 to vector<128x33xf32>
      %35 = arith.maximumf %33, %34 : vector<128x33xf32>
      %36 = tpu.iota {dimensions = array<i32: 0>} : vector<8x128xi32>
      %37 = vector.broadcast %12 : vector<1x128xi32> to vector<8x128xi32>
      %38 = arith.cmpi eq, %36, %37 : vector<8x128xi32>
      %39 = vector.broadcast %24 : vector<1x128xi1> to vector<8x128xi1>
      %40 = arith.andi %38, %39 : vector<8x128xi1>
      %41 = arith.extui %40 : vector<8x128xi1> to vector<8x128xi32>
      %42 = arith.sitofp %41 : vector<8x128xi32> to vector<8x128xf32>
      %c0_15 = arith.constant 0 : index
      %c1 = arith.constant 1 : index
      %c0_16 = arith.constant 0 : index
      %c0_17 = arith.constant 0 : index
      %43 = vector.load %arg10[%c0_15, %c1, %c0_16, %c0_17] : memref<1x2x8x33xf32, #tpu.memory_space<vmem>>, vector<1x1x8x33xf32>
      %44 = vector.shape_cast %43 : vector<1x1x8x33xf32> to vector<8x33xf32>
      %cst_18 = arith.constant dense<0.000000e+00> : vector<8x33xf32>
      %45 = tpu.matmul %42, %35, %cst_18 {dimension_numbers = #tpu.dot_dimension_numbers<[1], [0], [0], [1], [0, 0, 1, 1], [], []>} : vector<8x128xf32>, vector<128x33xf32>, vector<8x33xf32> -> vector<8x33xf32>
      %46 = arith.addf %44, %45 : vector<8x33xf32>
      %c0_19 = arith.constant 0 : index
      %c1_20 = arith.constant 1 : index
      %c0_21 = arith.constant 0 : index
      %c0_22 = arith.constant 0 : index
      %47 = vector.load %arg10[%c0_19, %c1_20, %c0_21, %c0_22] : memref<1x2x8x33xf32, #tpu.memory_space<vmem>>, vector<1x1x8x33xf32>
      %48 = vector.shape_cast %47 : vector<1x1x8x33xf32> to vector<8x33xf32>
      %49 = vector.shape_cast %46 : vector<8x33xf32> to vector<1x1x8x33xf32>
      tpu.vector_store %arg10[%c0_19, %c1_20, %c0_21, %c0_22], %49 {strides = array<i32>} : memref<1x2x8x33xf32, #tpu.memory_space<vmem>>, vector<1x1x8x33xf32>,
    } else {
    }
    return
  }
  func.func @transform_0(%arg0: i32, %arg1: i32) -> (i32, i32) {
    %c4_i32 = arith.constant 4 : i32
    %0 = arith.muli %arg0, %c4_i32 : i32
    %1 = arith.addi %0, %arg1 : i32
    %c2_i32 = arith.constant 2 : i32
    %2 = arith.minsi %1, %c2_i32 : i32
    %c0_i32 = arith.constant 0 : i32
    %c0_i32_0 = arith.constant 0 : i32
    return %c0_i32, %2 : i32, i32
  }
  func.func @transform_1(%arg0: i32, %arg1: i32) -> (i32, i32) {
    %c4_i32 = arith.constant 4 : i32
    %0 = arith.muli %arg0, %c4_i32 : i32
    %1 = arith.addi %0, %arg1 : i32
    %c3_i32 = arith.constant 3 : i32
    %2 = arith.subi %1, %c3_i32 : i32
    %c0_i32 = arith.constant 0 : i32
    %c3_i32_0 = arith.constant 3 : i32
    %3 = arith.maxsi %c0_i32, %2 : i32
    %4 = arith.minsi %c3_i32_0, %3 : i32
    %c0_i32_1 = arith.constant 0 : i32
    %c0_i32_2 = arith.constant 0 : i32
    return %c0_i32_1, %4 : i32, i32
  }
  func.func @transform_2(%arg0: i32, %arg1: i32) -> (i32, i32) {
    %c4_i32 = arith.constant 4 : i32
    %0 = arith.muli %arg0, %c4_i32 : i32
    %1 = arith.addi %0, %arg1 : i32
    %c2_i32 = arith.constant 2 : i32
    %2 = arith.minsi %1, %c2_i32 : i32
    %c0_i32 = arith.constant 0 : i32
    %c0_i32_0 = arith.constant 0 : i32
    return %2, %c0_i32 : i32, i32
  }
  func.func @transform_3(%arg0: i32, %arg1: i32) -> (i32, i32) {
    %c4_i32 = arith.constant 4 : i32
    %0 = arith.muli %arg0, %c4_i32 : i32
    %1 = arith.addi %0, %arg1 : i32
    %c3_i32 = arith.constant 3 : i32
    %2 = arith.subi %1, %c3_i32 : i32
    %c0_i32 = arith.constant 0 : i32
    %c3_i32_0 = arith.constant 3 : i32
    %3 = arith.maxsi %c0_i32, %2 : i32
    %4 = arith.minsi %c3_i32_0, %3 : i32
    %c0_i32_1 = arith.constant 0 : i32
    %c0_i32_2 = arith.constant 0 : i32
    return %4, %c0_i32_1 : i32, i32
  }
  func.func @transform_4(%arg0: i32, %arg1: i32) -> (i32, i32) {
    %c0_i32 = arith.constant 0 : i32
    %c0_i32_0 = arith.constant 0 : i32
    %c0_i32_1 = arith.constant 0 : i32
    return %c0_i32, %c0_i32_0 : i32, i32
  }
  func.func @transform_5(%arg0: i32, %arg1: i32) -> (i32, i32) {
    %c0_i32 = arith.constant 0 : i32
    %c0_i32_0 = arith.constant 0 : i32
    %c0_i32_1 = arith.constant 0 : i32
    return %c0_i32, %c0_i32_0 : i32, i32
  }
  func.func @transform_6(%arg0: i32, %arg1: i32) -> (i32, i32) {
    %c0_i32 = arith.constant 0 : i32
    %c0_i32_0 = arith.constant 0 : i32
    %c0_i32_1 = arith.constant 0 : i32
    return %c0_i32, %c0_i32_0 : i32, i32
  }
  func.func @transform_7(%arg0: i32, %arg1: i32) -> (i32, i32) {
    %c0_i32 = arith.constant 0 : i32
    %c0_i32_0 = arith.constant 0 : i32
    %c0_i32_1 = arith.constant 0 : i32
    return %c0_i32, %c0_i32_0 : i32, i32
  }
  func.func @transform_8(%arg0: i32, %arg1: i32) -> (i32, i32, i32, i32) {
    %c0_i32 = arith.constant 0 : i32
    %c0_i32_0 = arith.constant 0 : i32
    %c0_i32_1 = arith.constant 0 : i32
    %c0_i32_2 = arith.constant 0 : i32
    return %arg0, %c0_i32, %c0_i32_0, %c0_i32_1 : i32, i32, i32, i32
  }
}

module attributes {stable_mosaic.version = 11 : i64} {
  func.func @_finalize_kernel(%arg0: memref<2x2x8x33xf32, #tpu.memory_space<vmem>>, %arg1: memref<1x32xf32, #tpu.memory_space<vmem>>, %arg2: memref<1x32xf32, #tpu.memory_space<vmem>>, %arg3: memref<1x32xf32, #tpu.memory_space<vmem>>, %arg4: memref<1x32xf32, #tpu.memory_space<vmem>>, %arg5: memref<32x32xf32, #tpu.memory_space<vmem>>, %arg6: memref<32x32xf32, #tpu.memory_space<vmem>>, %arg7: memref<1x32xf32, #tpu.memory_space<vmem>>, %arg8: memref<1x32xf32, #tpu.memory_space<vmem>>, %arg9: memref<1x32xf32, #tpu.memory_space<vmem>>, %arg10: memref<32x128xf32, #tpu.memory_space<vmem>>, %arg11: memref<1x128xf32, #tpu.memory_space<vmem>>, %arg12: memref<8x128xf32, #tpu.memory_space<vmem>>) attributes {dimension_semantics = [], scalar_prefetch = 0 : i64, scratch_operands = 0 : i64, tpu.core_type = #tpu.core_type<tc>} {
    %c0 = arith.constant 0 : index
    %c0_0 = arith.constant 0 : index
    %c0_1 = arith.constant 0 : index
    %c0_2 = arith.constant 0 : index
    %0 = vector.load %arg0[%c0, %c0_0, %c0_1, %c0_2] : memref<2x2x8x33xf32, #tpu.memory_space<vmem>>, vector<1x1x8x33xf32>
    %1 = vector.shape_cast %0 : vector<1x1x8x33xf32> to vector<8x33xf32>
    %c1 = arith.constant 1 : index
    %c0_3 = arith.constant 0 : index
    %c0_4 = arith.constant 0 : index
    %c0_5 = arith.constant 0 : index
    %2 = vector.load %arg0[%c1, %c0_3, %c0_4, %c0_5] : memref<2x2x8x33xf32, #tpu.memory_space<vmem>>, vector<1x1x8x33xf32>
    %3 = vector.shape_cast %2 : vector<1x1x8x33xf32> to vector<8x33xf32>
    %4 = arith.addf %1, %3 : vector<8x33xf32>
    %c0_6 = arith.constant 0 : index
    %c1_7 = arith.constant 1 : index
    %c0_8 = arith.constant 0 : index
    %c0_9 = arith.constant 0 : index
    %5 = vector.load %arg0[%c0_6, %c1_7, %c0_8, %c0_9] : memref<2x2x8x33xf32, #tpu.memory_space<vmem>>, vector<1x1x8x33xf32>
    %6 = vector.shape_cast %5 : vector<1x1x8x33xf32> to vector<8x33xf32>
    %c1_10 = arith.constant 1 : index
    %c1_11 = arith.constant 1 : index
    %c0_12 = arith.constant 0 : index
    %c0_13 = arith.constant 0 : index
    %7 = vector.load %arg0[%c1_10, %c1_11, %c0_12, %c0_13] : memref<2x2x8x33xf32, #tpu.memory_space<vmem>>, vector<1x1x8x33xf32>
    %8 = vector.shape_cast %7 : vector<1x1x8x33xf32> to vector<8x33xf32>
    %9 = arith.addf %6, %8 : vector<8x33xf32>
    %10 = vector.extract_strided_slice %4 {offsets = [0, 0], sizes = [8, 32], strides = [1, 1]} : vector<8x33xf32> to vector<8x32xf32>
    %11 = vector.extract_strided_slice %4 {offsets = [0, 32], sizes = [8, 1], strides = [1, 1]} : vector<8x33xf32> to vector<8x1xf32>
    %cst = arith.constant 1.000000e+00 : f32
    %12 = vector.broadcast %cst : f32 to vector<8x1xf32>
    %13 = arith.maximumf %11, %12 : vector<8x1xf32>
    %14 = vector.broadcast %13 : vector<8x1xf32> to vector<8x32xf32>
    %15 = arith.divf %10, %14 : vector<8x32xf32>
    %16 = vector.extract_strided_slice %9 {offsets = [0, 0], sizes = [8, 32], strides = [1, 1]} : vector<8x33xf32> to vector<8x32xf32>
    %17 = vector.extract_strided_slice %9 {offsets = [0, 32], sizes = [8, 1], strides = [1, 1]} : vector<8x33xf32> to vector<8x1xf32>
    %cst_14 = arith.constant 1.000000e+00 : f32
    %18 = vector.broadcast %cst_14 : f32 to vector<8x1xf32>
    %19 = arith.maximumf %17, %18 : vector<8x1xf32>
    %20 = vector.broadcast %19 : vector<8x1xf32> to vector<8x32xf32>
    %21 = arith.divf %16, %20 : vector<8x32xf32>
    %cst_15 = arith.constant dense<0.000000e+00> : vector<8xf32>
    %22 = vector.multi_reduction <add>, %15, %cst_15 [1] : vector<8x32xf32> to vector<8xf32>
    %23 = vector.shape_cast %22 : vector<8xf32> to vector<8x1xf32>
    %cst_16 = arith.constant dense<0.000000e+00> : vector<8xf32>
    %24 = vector.multi_reduction <add>, %21, %cst_16 [1] : vector<8x32xf32> to vector<8xf32>
    %25 = vector.shape_cast %24 : vector<8xf32> to vector<8x1xf32>
    %26 = arith.addf %23, %25 : vector<8x1xf32>
    %cst_17 = arith.constant 6.400000e+01 : f32
    %27 = vector.broadcast %cst_17 : f32 to vector<8x1xf32>
    %28 = arith.divf %26, %27 : vector<8x1xf32>
    %29 = vector.broadcast %28 : vector<8x1xf32> to vector<8x32xf32>
    %30 = arith.subf %15, %29 : vector<8x32xf32>
    %31 = vector.broadcast %28 : vector<8x1xf32> to vector<8x32xf32>
    %32 = arith.subf %21, %31 : vector<8x32xf32>
    %33 = arith.mulf %30, %30 : vector<8x32xf32>
    %cst_18 = arith.constant dense<0.000000e+00> : vector<8xf32>
    %34 = vector.multi_reduction <add>, %33, %cst_18 [1] : vector<8x32xf32> to vector<8xf32>
    %35 = vector.shape_cast %34 : vector<8xf32> to vector<8x1xf32>
    %36 = arith.mulf %32, %32 : vector<8x32xf32>
    %cst_19 = arith.constant dense<0.000000e+00> : vector<8xf32>
    %37 = vector.multi_reduction <add>, %36, %cst_19 [1] : vector<8x32xf32> to vector<8xf32>
    %38 = vector.shape_cast %37 : vector<8xf32> to vector<8x1xf32>
    %39 = arith.addf %35, %38 : vector<8x1xf32>
    %cst_20 = arith.constant 6.400000e+01 : f32
    %40 = vector.broadcast %cst_20 : f32 to vector<8x1xf32>
    %41 = arith.divf %39, %40 : vector<8x1xf32>
    %cst_21 = arith.constant 9.99999974E-6 : f32
    %42 = vector.broadcast %cst_21 : f32 to vector<8x1xf32>
    %43 = arith.addf %41, %42 : vector<8x1xf32>
    %44 = math.rsqrt %43 : vector<8x1xf32>
    %45 = vector.broadcast %44 : vector<8x1xf32> to vector<8x32xf32>
    %46 = arith.mulf %30, %45 : vector<8x32xf32>
    %c0_22 = arith.constant 0 : index
    %c0_23 = arith.constant 0 : index
    %47 = vector.load %arg1[%c0_22, %c0_23] : memref<1x32xf32, #tpu.memory_space<vmem>>, vector<1x32xf32>
    %48 = vector.broadcast %47 : vector<1x32xf32> to vector<8x32xf32>
    %49 = arith.mulf %46, %48 : vector<8x32xf32>
    %c0_24 = arith.constant 0 : index
    %c0_25 = arith.constant 0 : index
    %50 = vector.load %arg2[%c0_24, %c0_25] : memref<1x32xf32, #tpu.memory_space<vmem>>, vector<1x32xf32>
    %51 = vector.broadcast %50 : vector<1x32xf32> to vector<8x32xf32>
    %52 = arith.addf %49, %51 : vector<8x32xf32>
    %53 = vector.broadcast %44 : vector<8x1xf32> to vector<8x32xf32>
    %54 = arith.mulf %32, %53 : vector<8x32xf32>
    %c0_26 = arith.constant 0 : index
    %c0_27 = arith.constant 0 : index
    %55 = vector.load %arg3[%c0_26, %c0_27] : memref<1x32xf32, #tpu.memory_space<vmem>>, vector<1x32xf32>
    %56 = vector.broadcast %55 : vector<1x32xf32> to vector<8x32xf32>
    %57 = arith.mulf %54, %56 : vector<8x32xf32>
    %c0_28 = arith.constant 0 : index
    %c0_29 = arith.constant 0 : index
    %58 = vector.load %arg4[%c0_28, %c0_29] : memref<1x32xf32, #tpu.memory_space<vmem>>, vector<1x32xf32>
    %59 = vector.broadcast %58 : vector<1x32xf32> to vector<8x32xf32>
    %60 = arith.addf %57, %59 : vector<8x32xf32>
    %c0_30 = arith.constant 0 : index
    %c0_31 = arith.constant 0 : index
    %61 = vector.load %arg5[%c0_30, %c0_31] : memref<32x32xf32, #tpu.memory_space<vmem>>, vector<32x32xf32>
    %cst_32 = arith.constant dense<0.000000e+00> : vector<8x32xf32>
    %62 = tpu.matmul %52, %61, %cst_32 {dimension_numbers = #tpu.dot_dimension_numbers<[1], [0], [0], [1], [0, 0, 1, 1], [], []>} : vector<8x32xf32>, vector<32x32xf32>, vector<8x32xf32> -> vector<8x32xf32>
    %c0_33 = arith.constant 0 : index
    %c0_34 = arith.constant 0 : index
    %63 = vector.load %arg6[%c0_33, %c0_34] : memref<32x32xf32, #tpu.memory_space<vmem>>, vector<32x32xf32>
    %cst_35 = arith.constant dense<0.000000e+00> : vector<8x32xf32>
    %64 = tpu.matmul %60, %63, %cst_35 {dimension_numbers = #tpu.dot_dimension_numbers<[1], [0], [0], [1], [0, 0, 1, 1], [], []>} : vector<8x32xf32>, vector<32x32xf32>, vector<8x32xf32> -> vector<8x32xf32>
    %65 = arith.addf %62, %64 : vector<8x32xf32>
    %c0_36 = arith.constant 0 : index
    %c0_37 = arith.constant 0 : index
    %66 = vector.load %arg7[%c0_36, %c0_37] : memref<1x32xf32, #tpu.memory_space<vmem>>, vector<1x32xf32>
    %67 = vector.broadcast %66 : vector<1x32xf32> to vector<8x32xf32>
    %68 = arith.addf %65, %67 : vector<8x32xf32>
    %cst_38 = arith.constant 0.000000e+00 : f32
    %69 = vector.broadcast %cst_38 : f32 to vector<8x32xf32>
    %70 = arith.maximumf %68, %69 : vector<8x32xf32>
    %cst_39 = arith.constant dense<0.000000e+00> : vector<8xf32>
    %71 = vector.multi_reduction <add>, %70, %cst_39 [1] : vector<8x32xf32> to vector<8xf32>
    %72 = vector.shape_cast %71 : vector<8xf32> to vector<8x1xf32>
    %cst_40 = arith.constant 3.200000e+01 : f32
    %73 = vector.broadcast %cst_40 : f32 to vector<8x1xf32>
    %74 = arith.divf %72, %73 : vector<8x1xf32>
    %75 = vector.broadcast %74 : vector<8x1xf32> to vector<8x32xf32>
    %76 = arith.subf %70, %75 : vector<8x32xf32>
    %77 = arith.mulf %76, %76 : vector<8x32xf32>
    %cst_41 = arith.constant dense<0.000000e+00> : vector<8xf32>
    %78 = vector.multi_reduction <add>, %77, %cst_41 [1] : vector<8x32xf32> to vector<8xf32>
    %79 = vector.shape_cast %78 : vector<8xf32> to vector<8x1xf32>
    %cst_42 = arith.constant 3.200000e+01 : f32
    %80 = vector.broadcast %cst_42 : f32 to vector<8x1xf32>
    %81 = arith.divf %79, %80 : vector<8x1xf32>
    %cst_43 = arith.constant 9.99999974E-6 : f32
    %82 = vector.broadcast %cst_43 : f32 to vector<8x1xf32>
    %83 = arith.addf %81, %82 : vector<8x1xf32>
    %84 = math.rsqrt %83 : vector<8x1xf32>
    %85 = vector.broadcast %84 : vector<8x1xf32> to vector<8x32xf32>
    %86 = arith.mulf %76, %85 : vector<8x32xf32>
    %c0_44 = arith.constant 0 : index
    %c0_45 = arith.constant 0 : index
    %87 = vector.load %arg8[%c0_44, %c0_45] : memref<1x32xf32, #tpu.memory_space<vmem>>, vector<1x32xf32>
    %88 = vector.broadcast %87 : vector<1x32xf32> to vector<8x32xf32>
    %89 = arith.mulf %86, %88 : vector<8x32xf32>
    %c0_46 = arith.constant 0 : index
    %c0_47 = arith.constant 0 : index
    %90 = vector.load %arg9[%c0_46, %c0_47] : memref<1x32xf32, #tpu.memory_space<vmem>>, vector<1x32xf32>
    %91 = vector.broadcast %90 : vector<1x32xf32> to vector<8x32xf32>
    %92 = arith.addf %89, %91 : vector<8x32xf32>
    %c0_48 = arith.constant 0 : index
    %c0_49 = arith.constant 0 : index
    %93 = vector.load %arg10[%c0_48, %c0_49] : memref<32x128xf32, #tpu.memory_space<vmem>>, vector<32x128xf32>
    %cst_50 = arith.constant dense<0.000000e+00> : vector<8x128xf32>
    %94 = tpu.matmul %92, %93, %cst_50 {dimension_numbers = #tpu.dot_dimension_numbers<[1], [0], [0], [1], [0, 0, 1, 1], [], []>} : vector<8x32xf32>, vector<32x128xf32>, vector<8x128xf32> -> vector<8x128xf32>
    %c0_51 = arith.constant 0 : index
    %c0_52 = arith.constant 0 : index
    %95 = vector.load %arg11[%c0_51, %c0_52] : memref<1x128xf32, #tpu.memory_space<vmem>>, vector<1x128xf32>
    %96 = vector.broadcast %95 : vector<1x128xf32> to vector<8x128xf32>
    %97 = arith.addf %94, %96 : vector<8x128xf32>
    %c0_53 = arith.constant 0 : index
    %c0_54 = arith.constant 0 : index
    %98 = vector.load %arg12[%c0_53, %c0_54] : memref<8x128xf32, #tpu.memory_space<vmem>>, vector<8x128xf32>
    tpu.vector_store %arg12[%c0_53, %c0_54], %97 {strides = array<i32>} : memref<8x128xf32, #tpu.memory_space<vmem>>, vector<8x128xf32>,
    return
  }
}

</mosaic_0001>

<llo_original>
// kernel: ds_node_edge_readout.3
$region0: #{ds_node_edge_readout.3}
  #allocation0 [shape = 'u32[]', space=smem, size = 0x4, offset = 0x4, fixed_abs, tag = 'smem constant byte address 0x4 - core index']
  #allocation1 [shape = 'u32[144,128]{1,0:T(1,128)}', space=vmem, size = 0x12000, scoped, tag = 'internal scratch']
  %s0 = inlined_call_operand.vmem [shape: f32[2,2,8,33], index: 0, kind: input, shape index: {}]
  %s1 = inlined_call_operand.vmem [shape: f32[1,32], index: 1, kind: input, shape index: {}]
  %s2 = inlined_call_operand.vmem [shape: f32[1,32], index: 2, kind: input, shape index: {}]
  %s3 = inlined_call_operand.vmem [shape: f32[1,32], index: 3, kind: input, shape index: {}]
  %s4 = inlined_call_operand.vmem [shape: f32[1,32], index: 4, kind: input, shape index: {}]
  %s5 = inlined_call_operand.vmem [shape: f32[32,32], index: 5, kind: input, shape index: {}]
  %s6 = inlined_call_operand.vmem [shape: f32[32,32], index: 6, kind: input, shape index: {}]
  %s7 = inlined_call_operand.vmem [shape: f32[1,32], index: 7, kind: input, shape index: {}]
  %s8 = inlined_call_operand.vmem [shape: f32[1,32], index: 8, kind: input, shape index: {}]
  %s9 = inlined_call_operand.vmem [shape: f32[1,32], index: 9, kind: input, shape index: {}]
  %s10 = inlined_call_operand.vmem [shape: f32[32,128], index: 10, kind: input, shape index: {}]
  %s11 = inlined_call_operand.vmem [shape: f32[1,128], index: 11, kind: input, shape index: {}]
  %s12 = inlined_call_operand.hbm [shape: f32[8,128], index: 12, kind: output, shape index: {}]
  %s13 = sld [smem:[#allocation0]]
  $region58: #{ds_node_edge_readout.3} parent=0
    _
  %s15 = ssub.s32 1, %s13
  %s16 = scalar_select 0, %s15, %s13
  $region1: #{ds_node_edge_readout.3} parent=0
    #allocation2 [shape = 'u8[4096]{0}', space=vmem, size = 0x1000, scoped, tag = 'output window, operand 0, single buffered']
    #allocation3 [shape = 's32[1]{0}', space=sflag, size = 0x4, scoped, tag = 'scoped memory for ds_node_edge_readout.3']
    %17 = vsyncpa [#allocation3], 0
    // Predicated region
    $region2: #{ds_node_edge_readout.3} parent=1 // pred_check
      _
    $region3: #{ds_node_edge_readout.3} parent=1 // pred_check_branch
      %19 = sbr.rel (0) target = $region5
    $region4: #{ds_node_edge_readout.3} parent=1 // pred_region
      _
    $region5: #{ds_node_edge_readout.3} parent=1 // pred_fallthru
      _
    // Predicated region
    $region6: #{ds_node_edge_readout.3} parent=1 // pred_check
      _
    $region7: #{ds_node_edge_readout.3} parent=1 // pred_check_branch
      %21 = sbr.rel (0) target = $region9
    $region8: #{ds_node_edge_readout.3} parent=1 // pred_region
      _
    $region9: #{ds_node_edge_readout.3} parent=1 // pred_fallthru
      _
    // Predicated region
    $region10: #{ds_node_edge_readout.3} parent=1 // pred_check
      _
    $region11: #{ds_node_edge_readout.3} parent=1 // pred_check_branch
      %23 = sbr.rel (0) target = $region13
    $region12: #{ds_node_edge_readout.3} parent=1 // pred_region
      _
    $region13: #{ds_node_edge_readout.3} parent=1 // pred_fallthru
      _
    // Predicated region
    $region14: #{ds_node_edge_readout.3} parent=1 // pred_check
      _
    $region15: #{ds_node_edge_readout.3} parent=1 // pred_check_branch
      %25 = sbr.rel (0) target = $region17
    $region16: #{ds_node_edge_readout.3} parent=1 // pred_region
      _
    $region17: #{ds_node_edge_readout.3} parent=1 // pred_fallthru
      _
    // Predicated region
    $region18: #{ds_node_edge_readout.3} parent=1 // pred_check
      _
    $region19: #{ds_node_edge_readout.3} parent=1 // pred_check_branch
      %27 = sbr.rel (0) target = $region21
    $region20: #{ds_node_edge_readout.3} parent=1 // pred_region
      _
    $region21: #{ds_node_edge_readout.3} parent=1 // pred_fallthru
      _
    // Predicated region
    $region22: #{ds_node_edge_readout.3} parent=1 // pred_check
      _
    $region23: #{ds_node_edge_readout.3} parent=1 // pred_check_branch
      %29 = sbr.rel (0) target = $region25
    $region24: #{ds_node_edge_readout.3} parent=1 // pred_region
      _
    $region25: #{ds_node_edge_readout.3} parent=1 // pred_fallthru
      _
    // Predicated region
    $region26: #{ds_node_edge_readout.3} parent=1 // pred_check
      _
    $region27: #{ds_node_edge_readout.3} parent=1 // pred_check_branch
      %31 = sbr.rel (0) target = $region29
    $region28: #{ds_node_edge_readout.3} parent=1 // pred_region
      _
    $region29: #{ds_node_edge_readout.3} parent=1 // pred_fallthru
      _
    // Predicated region
    $region30: #{ds_node_edge_readout.3} parent=1 // pred_check
      _
    $region31: #{ds_node_edge_readout.3} parent=1 // pred_check_branch
      %33 = sbr.rel (0) target = $region33
    $region32: #{ds_node_edge_readout.3} parent=1 // pred_region
      _
    $region33: #{ds_node_edge_readout.3} parent=1 // pred_fallthru
      _
    // Predicated region
    $region34: #{ds_node_edge_readout.3} parent=1 // pred_check
      _
    $region35: #{ds_node_edge_readout.3} parent=1 // pred_check_branch
      %35 = sbr.rel (0) target = $region37
    $region36: #{ds_node_edge_readout.3} parent=1 // pred_region
      _
    $region37: #{ds_node_edge_readout.3} parent=1 // pred_fallthru
      _
    // Predicated region
    $region38: #{ds_node_edge_readout.3} parent=1 // pred_check
      _
    $region39: #{ds_node_edge_readout.3} parent=1 // pred_check_branch
      %37 = sbr.rel (0) target = $region41
    $region40: #{ds_node_edge_readout.3} parent=1 // pred_region
      _
    $region41: #{ds_node_edge_readout.3} parent=1 // pred_fallthru
      _
    // Predicated region
    $region42: #{ds_node_edge_readout.3} parent=1 // pred_check
      _
    $region43: #{ds_node_edge_readout.3} parent=1 // pred_check_branch
      %39 = sbr.rel (0) target = $region45
    $region44: #{ds_node_edge_readout.3} parent=1 // pred_region
      _
    $region45: #{ds_node_edge_readout.3} parent=1 // pred_fallthru
      _
    // Predicated region
    $region46: #{ds_node_edge_readout.3} parent=1 // pred_check
      _
    $region47: #{ds_node_edge_readout.3} parent=1 // pred_check_branch
      %41 = sbr.rel (0) target = $region49
    $region48: #{ds_node_edge_readout.3} parent=1 // pred_region
      _
    $region49: #{ds_node_edge_readout.3} parent=1 // pred_fallthru
      _
    %v42 = vld [vmem:[%s0] sm:$0xff]
    %s43 = scalar_lea.vmem %s0, 16
    %v44 = vld [vmem:[%s43] sm:$0xff]
    %v45 = vadd.f32 %v42, %v44
    %s46 = scalar_lea.vmem %s0, 8
    %v47 = vld [vmem:[%s46] sm:$0xff]
    %s48 = scalar_lea.vmem %s0, 24
    %v49 = vld [vmem:[%s48] sm:$0xff]
    %v50 = vadd.f32 %v47, %v49
    %v51 = vmax.f32 %v45, 1.0
    %53 = vset.pattern.permute.xlu0 32
    %54 = vperm.xlu0 %53, %v51
    %v55 = vpop.permute.xlu0 %54
    %v57 = vrcp.pop %v55
    %v58 = vmul.f32 %v45, %v57
    %v59 = vmax.f32 %v50, 1.0
    %61 = vset.pattern.permute.xlu0 32
    %62 = vperm.xlu0 %61, %v59
    %v63 = vpop.permute.xlu0 %62
    %v65 = vrcp.pop %v63
    %v66 = vmul.f32 %v50, %v65
    %vm67 = vcmask 261120
    %v68 = vsel %vm67, %v58, 0.0
    %69 = vadd.xlane.f32.xlu0 %v68
    %v70 = vpop.xlane.xlu0 %69
    %v71 = vsel %vm67, %v66, 0.0
    %72 = vadd.xlane.f32.xlu0 %v71
    %v73 = vpop.xlane.xlu0 %72
    %v74 = vadd.f32 %v70, %v73
    %v75 = vrcp.pop 64.0
    %v76 = vmul.f32 %v74, %v75
    %v77 = vsub.f32 %v58, %v76
    %v78 = vsub.f32 %v66, %v76
    %v79 = vmul.f32 %v77, %v77
    %v80 = vsel %vm67, %v79, 0.0
    %81 = vadd.xlane.f32.xlu0 %v80
    %v82 = vpop.xlane.xlu0 %81
    %v83 = vmul.f32 %v78, %v78
    %v84 = vsel %vm67, %v83, 0.0
    %85 = vadd.xlane.f32.xlu0 %v84
    %v86 = vpop.xlane.xlu0 %85
    %v87 = vadd.f32 %v82, %v86
    %v88 = vmul.f32 %v87, %v75
    %v89 = vadd.f32 %v88, 1e-05
    %v90 = vrsqrt.pop %v89
    %v91 = vmul.f32 %v77, %v90
    %v92 = vld [vmem:[%s1] sm:$0x1]
    %v94 = vlaneseq
    %v95 = vshrl.u32 %v94, 7
    %v96 = vsub.s32 0, %v95
    %v97 = vrot.slane %v92, %v96
    %v99 = vmul.f32 %v91, %v97
    %v100 = vld [vmem:[%s2] sm:$0x1]
    %v102 = vlaneseq
    %v103 = vshrl.u32 %v102, 7
    %v104 = vsub.s32 0, %v103
    %v105 = vrot.slane %v100, %v104
    %v107 = vadd.f32 %v99, %v105
    %v108 = vmul.f32 %v78, %v90
    %v109 = vld [vmem:[%s3] sm:$0x1]
    %v111 = vlaneseq
    %v112 = vshrl.u32 %v111, 7
    %v113 = vsub.s32 0, %v112
    %v114 = vrot.slane %v109, %v113
    %v116 = vmul.f32 %v108, %v114
    %v117 = vld [vmem:[%s4] sm:$0x1]
    %v119 = vlaneseq
    %v120 = vshrl.u32 %v119, 7
    %v121 = vsub.s32 0, %v120
    %v122 = vrot.slane %v117, %v121
    %v124 = vadd.f32 %v116, %v122
    %v125 = vld [vmem:[%s5] sm:$0xff]
    %v126 = vld [vmem:[%s5 + $0x8] sm:$0xff]
    %v127 = vld [vmem:[%s5 + $0x10] sm:$0xff]
    %v128 = vld [vmem:[%s5 + $0x18] sm:$0xff]
    %v129 = vld [vmem:[%s6] sm:$0xff]
    %v130 = vld [vmem:[%s6 + $0x8] sm:$0xff]
    %v131 = vld [vmem:[%s6 + $0x10] sm:$0xff]
    %v132 = vld [vmem:[%s6 + $0x18] sm:$0xff]
    %v134 = vsel %vm67, %v124, 0
    %136 = vmatprep.subr.mxu0 0.0
    %137 = vmatpush1.msra.mxu0 0.0
    %138 = vmatprep.subr.mxu0 0.0
    %139 = vmatpush1.msra.mxu0 0.0
    %140 = vmatprep.subr.mxu0 0.0
    %141 = vmatpush1.msra.mxu0 0.0
    %142 = vmatprep.subr.mxu0 0.0
    %143 = vmatpush1.msra.mxu0 0.0
    %144 = vmatprep.subr.mxu0 0.0
    %145 = vmatpush1.msra.mxu0 0.0
    %146 = vmatprep.subr.mxu0 0.0
    %147 = vmatpush1.msra.mxu0 0.0
    %148 = vmatprep.subr.mxu0 0.0
    %149 = vmatpush1.msra.mxu0 0.0
    %150 = vmatprep.subr.mxu0 0.0
    %151 = vmatpush1.msra.mxu0 0.0
    %152 = vmatprep.subr.mxu0 0.0
    %153 = vmatpush1.msra.mxu0 0.0
    %154 = vmatprep.subr.mxu0 0.0
    %155 = vmatpush1.msra.mxu0 0.0
    %156 = vmatprep.subr.mxu0 0.0
    %157 = vmatpush1.msra.mxu0 0.0
    %158 = vmatprep.subr.mxu0 0.0
    %159 = vmatpush1.msra.mxu0 0.0
    %160 = vmatprep.subr.mxu0 0.0
    %161 = vmatpush1.msra.mxu0 %v132
    %162 = vmatprep.subr.mxu0 0.0
    %163 = vmatpush1.msra.mxu0 %v131
    %164 = vmatprep.subr.mxu0 0.0
    %165 = vmatpush1.msra.mxu0 %v130
    %166 = vmatprep.subr.mxu0 0.0
    %167 = vmatpush1.msra.mxu0 %v129
    %168 = vmatprep.subr.mxu0 0.0
    %169 = vmatpush2.msra.mxu0 0.0
    %170 = vmatprep.subr.mxu0 0.0
    %171 = vmatpush2.msra.mxu0 0.0
    %172 = vmatprep.subr.mxu0 0.0
    %173 = vmatpush2.msra.mxu0 0.0
    %174 = vmatprep.subr.mxu0 0.0
    %175 = vmatpush2.msra.mxu0 0.0
    %176 = vmatprep.subr.mxu0 0.0
    %177 = vmatpush2.msra.mxu0 0.0
    %178 = vmatprep.subr.mxu0 0.0
    %179 = vmatpush2.msra.mxu0 0.0
    %180 = vmatprep.subr.mxu0 0.0
    %181 = vmatpush2.msra.mxu0 0.0
    %182 = vmatprep.subr.mxu0 0.0
    %183 = vmatpush2.msra.mxu0 0.0
    %184 = vmatprep.subr.mxu0 0.0
    %185 = vmatpush2.msra.mxu0 0.0
    %186 = vmatprep.subr.mxu0 0.0
    %187 = vmatpush2.msra.mxu0 0.0
    %188 = vmatprep.subr.mxu0 0.0
    %189 = vmatpush2.msra.mxu0 0.0
    %190 = vmatprep.subr.mxu0 0.0
    %191 = vmatpush2.msra.mxu0 0.0
    %192 = vmatprep.subr.mxu0 0.0
    %193 = vmatpush2.msra.mxu0 0.0
    %194 = vmatprep.subr.mxu0 0.0
    %195 = vmatpush2.msra.mxu0 0.0
    %196 = vmatprep.subr.mxu0 0.0
    %197 = vmatpush2.msra.mxu0 0.0
    %198 = vmatprep.subr.mxu0 0.0
    %199 = vmatpush2.msra.mxu0 0.0
    %200 = vmatprep.mubr.f32.mxu0 0.0
    %201 = vmatmul.mubr.f32.gmra.mxu0 %v134
    %v202 = vpop.f32.mrf.mxu0
    %v203 = vadd.f32 0.0, %v202
    %v204 = vpop.f32.mrf.mxu0
    %205 = vdwg.mxu0
    %v207 = vsel %vm67, %v107, 0
    %209 = vmatprep.subr.mxu0 0.0
    %210 = vmatpush1.msra.mxu0 0.0
    %211 = vmatprep.subr.mxu0 0.0
    %212 = vmatpush1.msra.mxu0 0.0
    %213 = vmatprep.subr.mxu0 0.0
    %214 = vmatpush1.msra.mxu0 0.0
    %215 = vmatprep.subr.mxu0 0.0
    %216 = vmatpush1.msra.mxu0 0.0
    %217 = vmatprep.subr.mxu0 0.0
    %218 = vmatpush1.msra.mxu0 0.0
    %219 = vmatprep.subr.mxu0 0.0
    %220 = vmatpush1.msra.mxu0 0.0
    %221 = vmatprep.subr.mxu0 0.0
    %222 = vmatpush1.msra.mxu0 0.0
    %223 = vmatprep.subr.mxu0 0.0
    %224 = vmatpush1.msra.mxu0 0.0
    %225 = vmatprep.subr.mxu0 0.0
    %226 = vmatpush1.msra.mxu0 0.0
    %227 = vmatprep.subr.mxu0 0.0
    %228 = vmatpush1.msra.mxu0 0.0
    %229 = vmatprep.subr.mxu0 0.0
    %230 = vmatpush1.msra.mxu0 0.0
    %231 = vmatprep.subr.mxu0 0.0
    %232 = vmatpush1.msra.mxu0 0.0
    %233 = vmatprep.subr.mxu0 0.0
    %234 = vmatpush1.msra.mxu0 %v128
    %235 = vmatprep.subr.mxu0 0.0
    %236 = vmatpush1.msra.mxu0 %v127
    %237 = vmatprep.subr.mxu0 0.0
    %238 = vmatpush1.msra.mxu0 %v126
    %239 = vmatprep.subr.mxu0 0.0
    %240 = vmatpush1.msra.mxu0 %v125
    %241 = vmatprep.subr.mxu0 0.0
    %242 = vmatpush2.msra.mxu0 0.0
    %243 = vmatprep.subr.mxu0 0.0
    %244 = vmatpush2.msra.mxu0 0.0
    %245 = vmatprep.subr.mxu0 0.0
    %246 = vmatpush2.msra.mxu0 0.0
    %247 = vmatprep.subr.mxu0 0.0
    %248 = vmatpush2.msra.mxu0 0.0
    %249 = vmatprep.subr.mxu0 0.0
    %250 = vmatpush2.msra.mxu0 0.0
    %251 = vmatprep.subr.mxu0 0.0
    %252 = vmatpush2.msra.mxu0 0.0
    %253 = vmatprep.subr.mxu0 0.0
    %254 = vmatpush2.msra.mxu0 0.0
    %255 = vmatprep.subr.mxu0 0.0
    %256 = vmatpush2.msra.mxu0 0.0
    %257 = vmatprep.subr.mxu0 0.0
    %258 = vmatpush2.msra.mxu0 0.0
    %259 = vmatprep.subr.mxu0 0.0
    %260 = vmatpush2.msra.mxu0 0.0
    %261 = vmatprep.subr.mxu0 0.0
    %262 = vmatpush2.msra.mxu0 0.0
    %263 = vmatprep.subr.mxu0 0.0
    %264 = vmatpush2.msra.mxu0 0.0
    %265 = vmatprep.subr.mxu0 0.0
    %266 = vmatpush2.msra.mxu0 0.0
    %267 = vmatprep.subr.mxu0 0.0
    %268 = vmatpush2.msra.mxu0 0.0
    %269 = vmatprep.subr.mxu0 0.0
    %270 = vmatpush2.msra.mxu0 0.0
    %271 = vmatprep.subr.mxu0 0.0
    %272 = vmatpush2.msra.mxu0 0.0
    %273 = vmatprep.mubr.f32.mxu0 0.0
    %274 = vmatmul.mubr.f32.gmra.mxu0 %v207
    %v275 = vpop.f32.mrf.mxu0
    %v276 = vadd.f32 %v203, %v275
    %v277 = vpop.f32.mrf.mxu0
    %278 = vdwg.mxu0
    %v279 = vld [vmem:[%s7] sm:$0x1]
    %v281 = vlaneseq
    %v282 = vshrl.u32 %v281, 7
    %v283 = vsub.s32 0, %v282
    %v284 = vrot.slane %v279, %v283
    %v286 = vadd.f32 %v276, %v284
    %v287 = vmax.f32 %v286, 0.0
    %v288 = vsel %vm67, %v287, 0.0
    %289 = vadd.xlane.f32.xlu0 %v288
    %v290 = vpop.xlane.xlu0 %289
    %v291 = vrcp.pop 32.0
    %v292 = vmul.f32 %v290, %v291
    %v293 = vsub.f32 %v287, %v292
    %v294 = vmul.f32 %v293, %v293
    %v295 = vsel %vm67, %v294, 0.0
    %296 = vadd.xlane.f32.xlu0 %v295
    %v297 = vpop.xlane.xlu0 %296
    %v298 = vmul.f32 %v297, %v291
    %v299 = vadd.f32 %v298, 1e-05
    %v300 = vrsqrt.pop %v299
    %v301 = vmul.f32 %v293, %v300
    %v302 = vld [vmem:[%s8] sm:$0x1]
    %v304 = vlaneseq
    %v305 = vshrl.u32 %v304, 7
    %v306 = vsub.s32 0, %v305
    %v307 = vrot.slane %v302, %v306
    %v309 = vmul.f32 %v301, %v307
    %v310 = vld [vmem:[%s9] sm:$0x1]
    %v312 = vlaneseq
    %v313 = vshrl.u32 %v312, 7
    %v314 = vsub.s32 0, %v313
    %v315 = vrot.slane %v310, %v314
    %v317 = vadd.f32 %v309, %v315
    %v318 = vld [vmem:[%s10] sm:$0xff]
    %v319 = vld [vmem:[%s10 + $0x8] sm:$0xff]
    %v320 = vld [vmem:[%s10 + $0x10] sm:$0xff]
    %v321 = vld [vmem:[%s10 + $0x18] sm:$0xff]
    %v322 = vld [vmem:[%s11] sm:$0x1]
    %v324 = vlaneseq
    %v325 = vshrl.u32 %v324, 7
    %v326 = vsub.s32 0, %v325
    %v327 = vrot.slane %v322, %v326
    %v330 = vsel %vm67, %v317, 0
    %332 = vmatprep.subr.mxu0 0.0
    %333 = vmatpush1.msra.mxu0 0.0
    %334 = vmatprep.subr.mxu0 0.0
    %335 = vmatpush1.msra.mxu0 0.0
    %336 = vmatprep.subr.mxu0 0.0
    %337 = vmatpush1.msra.mxu0 0.0
    %338 = vmatprep.subr.mxu0 0.0
    %339 = vmatpush1.msra.mxu0 0.0
    %340 = vmatprep.subr.mxu0 0.0
    %341 = vmatpush1.msra.mxu0 0.0
    %342 = vmatprep.subr.mxu0 0.0
    %343 = vmatpush1.msra.mxu0 0.0
    %344 = vmatprep.subr.mxu0 0.0
    %345 = vmatpush1.msra.mxu0 0.0
    %346 = vmatprep.subr.mxu0 0.0
    %347 = vmatpush1.msra.mxu0 0.0
    %348 = vmatprep.subr.mxu0 0.0
    %349 = vmatpush1.msra.mxu0 0.0
    %350 = vmatprep.subr.mxu0 0.0
    %351 = vmatpush1.msra.mxu0 0.0
    %352 = vmatprep.subr.mxu0 0.0
    %353 = vmatpush1.msra.mxu0 0.0
    %354 = vmatprep.subr.mxu0 0.0
    %355 = vmatpush1.msra.mxu0 0.0
    %356 = vmatprep.subr.mxu0 0.0
    %357 = vmatpush1.msra.mxu0 %v321
    %358 = vmatprep.subr.mxu0 0.0
    %359 = vmatpush1.msra.mxu0 %v320
    %360 = vmatprep.subr.mxu0 0.0
    %361 = vmatpush1.msra.mxu0 %v319
    %362 = vmatprep.subr.mxu0 0.0
    %363 = vmatpush1.msra.mxu0 %v318
    %364 = vmatprep.subr.mxu0 0.0
    %365 = vmatpush2.msra.mxu0 0.0
    %366 = vmatprep.subr.mxu0 0.0
    %367 = vmatpush2.msra.mxu0 0.0
    %368 = vmatprep.subr.mxu0 0.0
    %369 = vmatpush2.msra.mxu0 0.0
    %370 = vmatprep.subr.mxu0 0.0
    %371 = vmatpush2.msra.mxu0 0.0
    %372 = vmatprep.subr.mxu0 0.0
    %373 = vmatpush2.msra.mxu0 0.0
    %374 = vmatprep.subr.mxu0 0.0
    %375 = vmatpush2.msra.mxu0 0.0
    %376 = vmatprep.subr.mxu0 0.0
    %377 = vmatpush2.msra.mxu0 0.0
    %378 = vmatprep.subr.mxu0 0.0
    %379 = vmatpush2.msra.mxu0 0.0
    %380 = vmatprep.subr.mxu0 0.0
    %381 = vmatpush2.msra.mxu0 0.0
    %382 = vmatprep.subr.mxu0 0.0
    %383 = vmatpush2.msra.mxu0 0.0
    %384 = vmatprep.subr.mxu0 0.0
    %385 = vmatpush2.msra.mxu0 0.0
    %386 = vmatprep.subr.mxu0 0.0
    %387 = vmatpush2.msra.mxu0 0.0
    %388 = vmatprep.subr.mxu0 0.0
    %389 = vmatpush2.msra.mxu0 0.0
    %390 = vmatprep.subr.mxu0 0.0
    %391 = vmatpush2.msra.mxu0 0.0
    %392 = vmatprep.subr.mxu0 0.0
    %393 = vmatpush2.msra.mxu0 0.0
    %394 = vmatprep.subr.mxu0 0.0
    %395 = vmatpush2.msra.mxu0 0.0
    %396 = vmatprep.mubr.f32.mxu0 0.0
    %397 = vmatmul.mubr.f32.gmra.mxu0 %v330
    %v398 = vpop.f32.mrf.mxu0
    %v399 = vadd.f32 %v327, %v398
    %v400 = vpop.f32.mrf.mxu0
    %401 = vdwg.mxu0
    %402 = vst [vmem:[#allocation2] sm:$0xff] %v399
    // Predicated region
    $region50: #{ds_node_edge_readout.3} parent=1 // pred_check
      _
    $region51: #{ds_node_edge_readout.3} parent=1 // pred_check_branch
      %404 = sbr.rel (0) target = $region53
    $region52: #{ds_node_edge_readout.3} parent=1 // pred_region
      %s406 = ssub.s32 128, 128
      %407 = vsyncadd [#allocation3], %s406
      %s409 = sshll.u32 [#allocation2], 4
      %s410 = int_to_ptr.vmem [resolvable:$true] %s409
      %412 = dma.vmem_to_hbm [thread:$0]  %s410, 128, %s12, [#allocation3]
    $region53: #{ds_node_edge_readout.3} parent=1 // pred_fallthru
      _
    // Predicated region
    $region54: #{ds_node_edge_readout.3} parent=1 // pred_check
      _
    $region55: #{ds_node_edge_readout.3} parent=1 // pred_check_branch
      %414 = sbr.rel (0) target = $region57
    $region56: #{ds_node_edge_readout.3} parent=1 // pred_region
      %415 = dma.done [#allocation3], 128
    $region57: #{ds_node_edge_readout.3} parent=1 // pred_fallthru
      _
    %416 = vsyncpa [#allocation3], 1

// kernel: ds_node_edge_readout.2
$region0: #{ds_node_edge_readout.2}
  #allocation0 [shape = 'u32[]', space=smem, size = 0x4, offset = 0x4, fixed_abs, tag = 'smem constant byte address 0x4 - core index']
  #allocation1 [shape = 'u32[144,128]{1,0:T(1,128)}', space=vmem, size = 0x12000, scoped, tag = 'internal scratch']
  %s0 = inlined_call_operand.vmem [shape: s32[1,300], index: 0, kind: input, shape index: {}]
  %s1 = inlined_call_operand.vmem [shape: s32[1,452], index: 1, kind: input, shape index: {}]
  %s2 = inlined_call_operand.vmem [shape: f32[300,16], index: 2, kind: input, shape index: {}]
  %s3 = inlined_call_operand.vmem [shape: f32[452,16], index: 3, kind: input, shape index: {}]
  %s4 = inlined_call_operand.vmem [shape: f32[16,33], index: 4, kind: input, shape index: {}]
  %s5 = inlined_call_operand.vmem [shape: f32[1,33], index: 5, kind: input, shape index: {}]
  %s6 = inlined_call_operand.vmem [shape: f32[16,33], index: 6, kind: input, shape index: {}]
  %s7 = inlined_call_operand.vmem [shape: f32[1,33], index: 7, kind: input, shape index: {}]
  %s8 = inlined_call_operand.vmem [shape: f32[2,2,8,33], index: 8, kind: output, shape index: {}]
  %s9 = sld [smem:[#allocation0]]
  $region77: #{ds_node_edge_readout.2} parent=0
    _
  %s11 = ssub.s32 1, %s9
  %s12 = scalar_select 0, %s11, %s9
  loop: start=0, step=1, limit=10
  $region2: #{ds_node_edge_readout.2} parent=0 // loop_pre_header
    _
  $region3: #{ds_node_edge_readout.2} parent=0 // loop_header
    %s14 = sphi 0, %s18
    %p15 = scmp.ge.s32.totalorder %s14, 10
    %s21 = sphi 0, %s33
    %s22 = sphi 0, %s29
    %s23 = sphi 0, %s21
    %s24 = sphi 0, %s22
    %s25 = sphi 0, %s23
    %s26 = sphi 0, %s24
    %s44 = sphi 0, %s46
    %s47 = sphi 0, %s44
    %s48 = sphi 0, %s47
    %s64 = sphi 0, %s48
    %s84 = sphi 0, %s86
    %s87 = sphi 0, %s84
    %s88 = sphi 0, %s87
    %s104 = sphi 0, %s88
    %s118 = sphi 0, %s120
    %s121 = sphi 0, %s118
    %s122 = sphi 0, %s121
    %s138 = sphi 0, %s122
    %s158 = sphi 0, %s160
    %s161 = sphi 0, %s158
    %s162 = sphi 0, %s161
    %s178 = sphi 0, %s162
    %s182 = sphi 0, %s182
    %s184 = sphi 0, %s182
    %s185 = sphi 0, %s184
    %s199 = sphi 0, %s185
    %s203 = sphi 0, %s203
    %s205 = sphi 0, %s203
    %s206 = sphi 0, %s205
    %s220 = sphi 0, %s206
    %s224 = sphi 0, %s224
    %s226 = sphi 0, %s224
    %s227 = sphi 0, %s226
    %s241 = sphi 0, %s227
    %s245 = sphi 0, %s245
    %s247 = sphi 0, %s245
    %s248 = sphi 0, %s247
    %s262 = sphi 0, %s248
    %s268 = sphi 0, %s270
    %s271 = sphi 0, %s268
    %s272 = sphi 0, %s271
    %s288 = sphi 0, %s272
  $region4: #{ds_node_edge_readout.2} parent=0 // loop_header_branch
    %17 = sbr.rel (%p15) target = $region8
  $region5: #{ds_node_edge_readout.2} parent=0 // loop_body
    %s19 = ssub.s32 %s14, 1
    %s20 = ssub.s32 %s14, 2
    %s27 = sadd.s32 1, %s22
    %p28 = scmp.ge.s32.totalorder %s27, 4
    %s29 = scalar_select %p28, 0, %s27
    %s30 = sadd.s32 1, %s21
    %s31 = scalar_select %p28, %s30, %s21
    %p32 = scmp.ge.s32.totalorder %s31, 2
    %s33 = scalar_select %p32, 0, %s31
    %s34 = smul.u32 %s21, 4
    %s35 = sadd.s32 %s34, %s22
    %p36 = scmp.lt.s32.totalorder %s35, 2
    %s37 = scalar_select %p36, %s35, 2
    %s38 = smul.u32 %s33, 4
    %s39 = sadd.s32 %s38, %s29
    %p40 = scmp.lt.s32.totalorder %s39, 2
    %s41 = scalar_select %p40, %s39, 2
    %s42 = ssub.s32 %s37, %s41
    %p43 = scmp.eq.s32.totalorder %s42, 0
    %s45 = sadd.s32 %s44, 1
    %s46 = scalar_select %p43, %s44, %s45
    %p49 = pneg %p43
    %p50 = scmp.eq.s32.totalorder %s14, 7
    %p51 = por %p49, %p50
    %p52 = scmp.ne.s32.totalorder %s44, %s47
    %p53 = scmp.eq.s32.totalorder %s14, 0
    %p54 = por %p52, %p53
    %p55 = scmp.ne.s32.totalorder %s44, %s47
    %p56 = scmp.eq.s32.totalorder %s19, 7
    %p57 = por %p55, %p56
    %p58 = scmp.ne.s32.totalorder %s47, %s48
    %p59 = scmp.eq.s32.totalorder %s19, 0
    %p60 = por %p58, %p59
    %p61 = scmp.ne.s32.totalorder %s47, %s48
    %p62 = scmp.eq.s32.totalorder %s20, 7
    %p63 = por %p61, %p62
    %p65 = scmp.ne.s32.totalorder %s48, %s64
    %p66 = scmp.eq.s32.totalorder %s20, 0
    %p67 = por %p65, %p66
    %s68 = smul.u32 %s21, 4
    %s69 = sadd.s32 %s68, %s22
    %s70 = ssub.s32 %s69, 3
    %p71 = scmp.gt.s32.totalorder %s70, 0
    %s72 = scalar_select %p71, %s70, 0
    %p73 = scmp.lt.s32.totalorder %s72, 3
    %s74 = scalar_select %p73, %s72, 3
    %s75 = smul.u32 %s33, 4
    %s76 = sadd.s32 %s75, %s29
    %s77 = ssub.s32 %s76, 3
    %p78 = scmp.gt.s32.totalorder %s77, 0
    %s79 = scalar_select %p78, %s77, 0
    %p80 = scmp.lt.s32.totalorder %s79, 3
    %s81 = scalar_select %p80, %s79, 3
    %s82 = ssub.s32 %s74, %s81
    %p83 = scmp.eq.s32.totalorder %s82, 0
    %s85 = sadd.s32 %s84, 1
    %s86 = scalar_select %p83, %s84, %s85
    %p89 = pneg %p83
    %p90 = scmp.eq.s32.totalorder %s14, 7
    %p91 = por %p89, %p90
    %p92 = scmp.ne.s32.totalorder %s84, %s87
    %p93 = scmp.eq.s32.totalorder %s14, 0
    %p94 = por %p92, %p93
    %p95 = scmp.ne.s32.totalorder %s84, %s87
    %p96 = scmp.eq.s32.totalorder %s19, 7
    %p97 = por %p95, %p96
    %p98 = scmp.ne.s32.totalorder %s87, %s88
    %p99 = scmp.eq.s32.totalorder %s19, 0
    %p100 = por %p98, %p99
    %p101 = scmp.ne.s32.totalorder %s87, %s88
    %p102 = scmp.eq.s32.totalorder %s20, 7
    %p103 = por %p101, %p102
    %p105 = scmp.ne.s32.totalorder %s88, %s104
    %p106 = scmp.eq.s32.totalorder %s20, 0
    %p107 = por %p105, %p106
    %s108 = smul.u32 %s21, 4
    %s109 = sadd.s32 %s108, %s22
    %p110 = scmp.lt.s32.totalorder %s109, 2
    %s111 = scalar_select %p110, %s109, 2
    %s112 = smul.u32 %s33, 4
    %s113 = sadd.s32 %s112, %s29
    %p114 = scmp.lt.s32.totalorder %s113, 2
    %s115 = scalar_select %p114, %s113, 2
    %s116 = ssub.s32 %s111, %s115
    %p117 = scmp.eq.s32.totalorder %s116, 0
    %s119 = sadd.s32 %s118, 1
    %s120 = scalar_select %p117, %s118, %s119
    %p123 = pneg %p117
    %p124 = scmp.eq.s32.totalorder %s14, 7
    %p125 = por %p123, %p124
    %p126 = scmp.ne.s32.totalorder %s118, %s121
    %p127 = scmp.eq.s32.totalorder %s14, 0
    %p128 = por %p126, %p127
    %p129 = scmp.ne.s32.totalorder %s118, %s121
    %p130 = scmp.eq.s32.totalorder %s19, 7
    %p131 = por %p129, %p130
    %p132 = scmp.ne.s32.totalorder %s121, %s122
    %p133 = scmp.eq.s32.totalorder %s19, 0
    %p134 = por %p132, %p133
    %p135 = scmp.ne.s32.totalorder %s121, %s122
    %p136 = scmp.eq.s32.totalorder %s20, 7
    %p137 = por %p135, %p136
    %p139 = scmp.ne.s32.totalorder %s122, %s138
    %p140 = scmp.eq.s32.totalorder %s20, 0
    %p141 = por %p139, %p140
    %s142 = smul.u32 %s21, 4
    %s143 = sadd.s32 %s142, %s22
    %s144 = ssub.s32 %s143, 3
    %p145 = scmp.gt.s32.totalorder %s144, 0
    %s146 = scalar_select %p145, %s144, 0
    %p147 = scmp.lt.s32.totalorder %s146, 3
    %s148 = scalar_select %p147, %s146, 3
    %s149 = smul.u32 %s33, 4
    %s150 = sadd.s32 %s149, %s29
    %s151 = ssub.s32 %s150, 3
    %p152 = scmp.gt.s32.totalorder %s151, 0
    %s153 = scalar_select %p152, %s151, 0
    %p154 = scmp.lt.s32.totalorder %s153, 3
    %s155 = scalar_select %p154, %s153, 3
    %s156 = ssub.s32 %s148, %s155
    %p157 = scmp.eq.s32.totalorder %s156, 0
    %s159 = sadd.s32 %s158, 1
    %s160 = scalar_select %p157, %s158, %s159
    %p163 = pneg %p157
    %p164 = scmp.eq.s32.totalorder %s14, 7
    %p165 = por %p163, %p164
    %p166 = scmp.ne.s32.totalorder %s158, %s161
    %p167 = scmp.eq.s32.totalorder %s14, 0
    %p168 = por %p166, %p167
    %p169 = scmp.ne.s32.totalorder %s158, %s161
    %p170 = scmp.eq.s32.totalorder %s19, 7
    %p171 = por %p169, %p170
    %p172 = scmp.ne.s32.totalorder %s161, %s162
    %p173 = scmp.eq.s32.totalorder %s19, 0
    %p174 = por %p172, %p173
    %p175 = scmp.ne.s32.totalorder %s161, %s162
    %p176 = scmp.eq.s32.totalorder %s20, 7
    %p177 = por %p175, %p176
    %p179 = scmp.ne.s32.totalorder %s162, %s178
    %p180 = scmp.eq.s32.totalorder %s20, 0
    %p181 = por %p179, %p180
    %s183 = sadd.s32 %s182, 1
    %p186 = scmp.eq.s32.totalorder %s14, 7
    %p187 = scmp.ne.s32.totalorder %s182, %s184
    %p188 = scmp.eq.s32.totalorder %s14, 0
    %p189 = por %p187, %p188
    %p190 = scmp.ne.s32.totalorder %s182, %s184
    %p191 = scmp.eq.s32.totalorder %s19, 7
    %p192 = por %p190, %p191
    %p193 = scmp.ne.s32.totalorder %s184, %s185
    %p194 = scmp.eq.s32.totalorder %s19, 0
    %p195 = por %p193, %p194
    %p196 = scmp.ne.s32.totalorder %s184, %s185
    %p197 = scmp.eq.s32.totalorder %s20, 7
    %p198 = por %p196, %p197
    %p200 = scmp.ne.s32.totalorder %s185, %s199
    %p201 = scmp.eq.s32.totalorder %s20, 0
    %p202 = por %p200, %p201
    %s204 = sadd.s32 %s203, 1
    %p207 = scmp.eq.s32.totalorder %s14, 7
    %p208 = scmp.ne.s32.totalorder %s203, %s205
    %p209 = scmp.eq.s32.totalorder %s14, 0
    %p210 = por %p208, %p209
    %p211 = scmp.ne.s32.totalorder %s203, %s205
    %p212 = scmp.eq.s32.totalorder %s19, 7
    %p213 = por %p211, %p212
    %p214 = scmp.ne.s32.totalorder %s205, %s206
    %p215 = scmp.eq.s32.totalorder %s19, 0
    %p216 = por %p214, %p215
    %p217 = scmp.ne.s32.totalorder %s205, %s206
    %p218 = scmp.eq.s32.totalorder %s20, 7
    %p219 = por %p217, %p218
    %p221 = scmp.ne.s32.totalorder %s206, %s220
    %p222 = scmp.eq.s32.totalorder %s20, 0
    %p223 = por %p221, %p222
    %s225 = sadd.s32 %s224, 1
    %p228 = scmp.eq.s32.totalorder %s14, 7
    %p229 = scmp.ne.s32.totalorder %s224, %s226
    %p230 = scmp.eq.s32.totalorder %s14, 0
    %p231 = por %p229, %p230
    %p232 = scmp.ne.s32.totalorder %s224, %s226
    %p233 = scmp.eq.s32.totalorder %s19, 7
    %p234 = por %p232, %p233
    %p235 = scmp.ne.s32.totalorder %s226, %s227
    %p236 = scmp.eq.s32.totalorder %s19, 0
    %p237 = por %p235, %p236
    %p238 = scmp.ne.s32.totalorder %s226, %s227
    %p239 = scmp.eq.s32.totalorder %s20, 7
    %p240 = por %p238, %p239
    %p242 = scmp.ne.s32.totalorder %s227, %s241
    %p243 = scmp.eq.s32.totalorder %s20, 0
    %p244 = por %p242, %p243
    %s246 = sadd.s32 %s245, 1
    %p249 = scmp.eq.s32.totalorder %s14, 7
    %p250 = scmp.ne.s32.totalorder %s245, %s247
    %p251 = scmp.eq.s32.totalorder %s14, 0
    %p252 = por %p250, %p251
    %p253 = scmp.ne.s32.totalorder %s245, %s247
    %p254 = scmp.eq.s32.totalorder %s19, 7
    %p255 = por %p253, %p254
    %p256 = scmp.ne.s32.totalorder %s247, %s248
    %p257 = scmp.eq.s32.totalorder %s19, 0
    %p258 = por %p256, %p257
    %p259 = scmp.ne.s32.totalorder %s247, %s248
    %p260 = scmp.eq.s32.totalorder %s20, 7
    %p261 = por %p259, %p260
    %p263 = scmp.ne.s32.totalorder %s248, %s262
    %p264 = scmp.eq.s32.totalorder %s20, 0
    %p265 = por %p263, %p264
    %s266 = ssub.s32 %s21, %s33
    %p267 = scmp.eq.s32.totalorder %s266, 0
    %s269 = sadd.s32 %s268, 1
    %s270 = scalar_select %p267, %s268, %s269
    %p273 = pneg %p267
    %p274 = scmp.eq.s32.totalorder %s14, 7
    %p275 = por %p273, %p274
    %p276 = scmp.ne.s32.totalorder %s268, %s271
    %p277 = scmp.eq.s32.totalorder %s14, 0
    %p278 = por %p276, %p277
    %p279 = scmp.ne.s32.totalorder %s268, %s271
    %p280 = scmp.eq.s32.totalorder %s19, 7
    %p281 = por %p279, %p280
    %p282 = scmp.ne.s32.totalorder %s271, %s272
    %p283 = scmp.eq.s32.totalorder %s19, 0
    %p284 = por %p282, %p283
    %p285 = scmp.ne.s32.totalorder %s271, %s272
    %p286 = scmp.eq.s32.totalorder %s20, 7
    %p287 = por %p285, %p286
    %p289 = scmp.ne.s32.totalorder %s272, %s288
    %p290 = scmp.eq.s32.totalorder %s20, 0
    %p291 = por %p289, %p290
    %p292 = scmp.le.s32.totalorder 1, %s14
    %p293 = scmp.lt.s32.totalorder %s14, 9
    %p294 = pnand %p292, %p293
    %p295 = pneg %p294
    // Predicated region
    $region9: #{ds_node_edge_readout.2} parent=5 // pred_check
      _
    $region10: #{ds_node_edge_readout.2} parent=5 // pred_check_branch
      %297 = sbr.rel (%p294) target = $region12
    $region11: #{ds_node_edge_readout.2} parent=5 // pred_region
      %s298 = ssub.s32 %s14, 1
      // Predicated region
      $region13: #{ds_node_edge_readout.2} parent=11 // pred_check
        %p299 = pneg %p195
      $region14: #{ds_node_edge_readout.2} parent=11 // pred_check_branch
        %301 = sbr.rel (%p299) target = $region16
      $region15: #{ds_node_edge_readout.2} parent=11 // pred_region
        _
      $region16: #{ds_node_edge_readout.2} parent=11 // pred_fallthru
        _
      // Predicated region
      $region17: #{ds_node_edge_readout.2} parent=11 // pred_check
        %p302 = pneg %p216
      $region18: #{ds_node_edge_readout.2} parent=11 // pred_check_branch
        %304 = sbr.rel (%p302) target = $region20
      $region19: #{ds_node_edge_readout.2} parent=11 // pred_region
        _
      $region20: #{ds_node_edge_readout.2} parent=11 // pred_fallthru
        _
      // Predicated region
      $region21: #{ds_node_edge_readout.2} parent=11 // pred_check
        %p305 = pneg %p237
      $region22: #{ds_node_edge_readout.2} parent=11 // pred_check_branch
        %307 = sbr.rel (%p305) target = $region24
      $region23: #{ds_node_edge_readout.2} parent=11 // pred_region
        _
      $region24: #{ds_node_edge_readout.2} parent=11 // pred_fallthru
        _
      // Predicated region
      $region25: #{ds_node_edge_readout.2} parent=11 // pred_check
        %p308 = pneg %p258
      $region26: #{ds_node_edge_readout.2} parent=11 // pred_check_branch
        %310 = sbr.rel (%p308) target = $region28
      $region27: #{ds_node_edge_readout.2} parent=11 // pred_region
        _
      $region28: #{ds_node_edge_readout.2} parent=11 // pred_fallthru
        _
    $region12: #{ds_node_edge_readout.2} parent=5 // pred_fallthru
      _
    %p311 = scmp.lt.s32.totalorder %s14, 8
    // Predicated region
    $region29: #{ds_node_edge_readout.2} parent=5 // pred_check
      %p312 = pneg %p311
    $region30: #{ds_node_edge_readout.2} parent=5 // pred_check_branch
      %314 = sbr.rel (%p312) target = $region32
    $region31: #{ds_node_edge_readout.2} parent=5 // pred_region
      // Predicated region
      $region33: #{ds_node_edge_readout.2} parent=31 // pred_check
        %p315 = pneg %p54
      $region34: #{ds_node_edge_readout.2} parent=31 // pred_check_branch
        %317 = sbr.rel (%p315) target = $region36
      $region35: #{ds_node_edge_readout.2} parent=31 // pred_region
        %s318 = smul.u32 %s21, 4
        %s319 = sadd.s32 %s318, %s22
        %p320 = scmp.lt.s32.totalorder %s319, 2
        %s321 = scalar_select %p320, %s319, 2
        %p322 = scmp.lt.s32.totalorder %s321, 2
        %s323 = scalar_select %p322, %s321, 2
        %s324 = scalar_lea.vmem %s0, %s323
        %s325 = smul.u32 %s21, 4
        %s326 = sadd.s32 %s325, %s22
        %p327 = scmp.lt.s32.totalorder %s326, 2
        %s328 = scalar_select %p327, %s326, 2
      $region36: #{ds_node_edge_readout.2} parent=31 // pred_fallthru
        _
      // Predicated region
      $region37: #{ds_node_edge_readout.2} parent=31 // pred_check
        %p329 = pneg %p94
      $region38: #{ds_node_edge_readout.2} parent=31 // pred_check_branch
        %331 = sbr.rel (%p329) target = $region40
      $region39: #{ds_node_edge_readout.2} parent=31 // pred_region
        %s332 = smul.u32 %s21, 4
        %s333 = sadd.s32 %s332, %s22
        %s334 = ssub.s32 %s333, 3
        %p335 = scmp.gt.s32.totalorder %s334, 0
        %s336 = scalar_select %p335, %s334, 0
        %p337 = scmp.lt.s32.totalorder %s336, 3
        %s338 = scalar_select %p337, %s336, 3
        %p339 = scmp.lt.s32.totalorder %s338, 3
        %s340 = scalar_select %p339, %s338, 3
        %s341 = scalar_lea.vmem %s1, %s340
        %s342 = smul.u32 %s21, 4
        %s343 = sadd.s32 %s342, %s22
        %s344 = ssub.s32 %s343, 3
        %p345 = scmp.gt.s32.totalorder %s344, 0
        %s346 = scalar_select %p345, %s344, 0
        %p347 = scmp.lt.s32.totalorder %s346, 3
        %s348 = scalar_select %p347, %s346, 3
      $region40: #{ds_node_edge_readout.2} parent=31 // pred_fallthru
        _
      // Predicated region
      $region41: #{ds_node_edge_readout.2} parent=31 // pred_check
        %p349 = pneg %p128
      $region42: #{ds_node_edge_readout.2} parent=31 // pred_check_branch
        %351 = sbr.rel (%p349) target = $region44
      $region43: #{ds_node_edge_readout.2} parent=31 // pred_region
        %s352 = smul.u32 %s21, 4
        %s353 = sadd.s32 %s352, %s22
        %p354 = scmp.lt.s32.totalorder %s353, 2
        %s355 = scalar_select %p354, %s353, 2
        %s356 = smul.u32 16, %s355
        %s357 = ssub.s32 38, %s356
        %p358 = scmp.lt.s32.totalorder %s357, 16
        %s359 = scalar_select %p358, %s357, 16
        %s360 = smul.u32 128, %s359
        %p361 = scmp.lt.s32.totalorder %s356, 37
        %s362 = scalar_select %p361, %s356, 37
        %s363 = smul.addr %s362, 8
        %s364 = scalar_lea.vmem %s2, %s363
        %s365 = smul.u32 %s21, 4
        %s366 = sadd.s32 %s365, %s22
        %p367 = scmp.lt.s32.totalorder %s366, 2
        %s368 = scalar_select %p367, %s366, 2
        %s369 = smul.u32 16, %s368
        %s370 = ssub.s32 38, %s369
        %p371 = scmp.lt.s32.totalorder %s370, 16
        %s372 = scalar_select %p371, %s370, 16
        %s373 = smul.u32 128, %s372
      $region44: #{ds_node_edge_readout.2} parent=31 // pred_fallthru
        _
      // Predicated region
      $region45: #{ds_node_edge_readout.2} parent=31 // pred_check
        %p374 = pneg %p168
      $region46: #{ds_node_edge_readout.2} parent=31 // pred_check_branch
        %376 = sbr.rel (%p374) target = $region48
      $region47: #{ds_node_edge_readout.2} parent=31 // pred_region
        %s377 = smul.u32 %s21, 4
        %s378 = sadd.s32 %s377, %s22
        %s379 = ssub.s32 %s378, 3
        %p380 = scmp.gt.s32.totalorder %s379, 0
        %s381 = scalar_select %p380, %s379, 0
        %p382 = scmp.lt.s32.totalorder %s381, 3
        %s383 = scalar_select %p382, %s381, 3
        %s384 = smul.u32 16, %s383
        %s385 = ssub.s32 57, %s384
        %p386 = scmp.lt.s32.totalorder %s385, 16
        %s387 = scalar_select %p386, %s385, 16
        %s388 = smul.u32 128, %s387
        %p389 = scmp.lt.s32.totalorder %s384, 56
        %s390 = scalar_select %p389, %s384, 56
        %s391 = smul.addr %s390, 8
        %s392 = scalar_lea.vmem %s3, %s391
        %s393 = smul.u32 %s21, 4
        %s394 = sadd.s32 %s393, %s22
        %s395 = ssub.s32 %s394, 3
        %p396 = scmp.gt.s32.totalorder %s395, 0
        %s397 = scalar_select %p396, %s395, 0
        %p398 = scmp.lt.s32.totalorder %s397, 3
        %s399 = scalar_select %p398, %s397, 3
        %s400 = smul.u32 16, %s399
        %s401 = ssub.s32 57, %s400
        %p402 = scmp.lt.s32.totalorder %s401, 16
        %s403 = scalar_select %p402, %s401, 16
        %s404 = smul.u32 128, %s403
      $region48: #{ds_node_edge_readout.2} parent=31 // pred_fallthru
        _
    $region32: #{ds_node_edge_readout.2} parent=5 // pred_fallthru
      _
    %p405 = scmp.le.s32.totalorder 1, %s14
    %p406 = scmp.lt.s32.totalorder %s14, 9
    %p407 = pnand %p405, %p406
    %p408 = pneg %p407
    // Predicated region
    $region49: #{ds_node_edge_readout.2} parent=5 // pred_check
      _
    $region50: #{ds_node_edge_readout.2} parent=5 // pred_check_branch
      %410 = sbr.rel (%p407) target = $region52
    $region51: #{ds_node_edge_readout.2} parent=5 // pred_region
      %s411 = ssub.s32 %s14, 1
      %s412 = smul.u32 %s23, 4
      %s413 = sadd.s32 %s412, %s24
      %p414 = scmp.lt.s32.totalorder %s413, 2
      %s415 = scalar_select %p414, %s413, 2
      %p416 = scmp.lt.s32.totalorder %s415, 2
      %s417 = scalar_select %p416, %s415, 2
      %s418 = scalar_lea.vmem %s0, %s417
      %p419 = pneg %p60
      %p420 = pneg %p57
      %s421 = smul.u32 %s23, 4
      %s422 = sadd.s32 %s421, %s24
      %s423 = ssub.s32 %s422, 3
      %p424 = scmp.gt.s32.totalorder %s423, 0
      %s425 = scalar_select %p424, %s423, 0
      %p426 = scmp.lt.s32.totalorder %s425, 3
      %s427 = scalar_select %p426, %s425, 3
      %p428 = scmp.lt.s32.totalorder %s427, 3
      %s429 = scalar_select %p428, %s427, 3
      %s430 = scalar_lea.vmem %s1, %s429
      %p431 = pneg %p100
      %p432 = pneg %p97
      %s433 = smul.u32 %s23, 4
      %s434 = sadd.s32 %s433, %s24
      %p435 = scmp.lt.s32.totalorder %s434, 2
      %s436 = scalar_select %p435, %s434, 2
      %s437 = smul.u32 16, %s436
      %s438 = ssub.s32 38, %s437
      %p439 = scmp.lt.s32.totalorder %s438, 16
      %s440 = scalar_select %p439, %s438, 16
      %s441 = smul.u32 128, %s440
      %p442 = scmp.lt.s32.totalorder %s437, 37
      %s443 = scalar_select %p442, %s437, 37
      %s444 = smul.addr %s443, 8
      %s445 = scalar_lea.vmem %s2, %s444
      %p446 = pneg %p134
      %p447 = pneg %p131
      %s448 = smul.u32 %s23, 4
      %s449 = sadd.s32 %s448, %s24
      %s450 = ssub.s32 %s449, 3
      %p451 = scmp.gt.s32.totalorder %s450, 0
      %s452 = scalar_select %p451, %s450, 0
      %p453 = scmp.lt.s32.totalorder %s452, 3
      %s454 = scalar_select %p453, %s452, 3
      %s455 = smul.u32 16, %s454
      %s456 = ssub.s32 57, %s455
      %p457 = scmp.lt.s32.totalorder %s456, 16
      %s458 = scalar_select %p457, %s456, 16
      %s459 = smul.u32 128, %s458
      %p460 = scmp.lt.s32.totalorder %s455, 56
      %s461 = scalar_select %p460, %s455, 56
      %s462 = smul.addr %s461, 8
      %s463 = scalar_lea.vmem %s3, %s462
      %p464 = pneg %p174
      %p465 = pneg %p171
      %p466 = pneg %p195
      %p467 = pneg %p192
      %p468 = pneg %p216
      %p469 = pneg %p213
      %p470 = pneg %p237
      %p471 = pneg %p234
      %p472 = pneg %p258
      %p473 = pneg %p255
      %p474 = pneg %p284
      %p475 = pneg %p281
      %p476 = scmp.lt.s32.totalorder %s23, 1
      %s477 = scalar_select %p476, %s23, 1
      %s478 = smul.addr %s477, 2
      %s479 = smul.addr %s478, 8
      %s480 = scalar_lea.vmem %s8, %s479
      %s481 = smul.u32 %s23, 4
      %s482 = sadd.s32 %s481, %s24
      %p483 = scmp.lt.s32.totalorder %s482, 2
      %s484 = scalar_select %p483, %s482, 2
      %p485 = scmp.lt.s32.totalorder %s484, 2
      %s486 = scalar_select %p485, %s484, 2
      %s487 = scalar_lea.vmem %s0, %s486
      %s488 = smul.u32 %s23, 4
      %s489 = sadd.s32 %s488, %s24
      %p490 = scmp.lt.s32.totalorder %s489, 2
      %s491 = scalar_select %p490, %s489, 2
      %s492 = smul.u32 %s23, 4
      %s493 = sadd.s32 %s492, %s24
      %s494 = ssub.s32 %s493, 3
      %p495 = scmp.gt.s32.totalorder %s494, 0
      %s496 = scalar_select %p495, %s494, 0
      %p497 = scmp.lt.s32.totalorder %s496, 3
      %s498 = scalar_select %p497, %s496, 3
      %p499 = scmp.lt.s32.totalorder %s498, 3
      %s500 = scalar_select %p499, %s498, 3
      %s501 = scalar_lea.vmem %s1, %s500
      %s502 = smul.u32 %s23, 4
      %s503 = sadd.s32 %s502, %s24
      %s504 = ssub.s32 %s503, 3
      %p505 = scmp.gt.s32.totalorder %s504, 0
      %s506 = scalar_select %p505, %s504, 0
      %p507 = scmp.lt.s32.totalorder %s506, 3
      %s508 = scalar_select %p507, %s506, 3
      %s509 = smul.u32 %s23, 4
      %s510 = sadd.s32 %s509, %s24
      %p511 = scmp.lt.s32.totalorder %s510, 2
      %s512 = scalar_select %p511, %s510, 2
      %s513 = smul.u32 16, %s512
      %s514 = ssub.s32 38, %s513
      %p515 = scmp.lt.s32.totalorder %s514, 16
      %s516 = scalar_select %p515, %s514, 16
      %s517 = smul.u32 128, %s516
      %p518 = scmp.lt.s32.totalorder %s513, 37
      %s519 = scalar_select %p518, %s513, 37
      %s520 = smul.addr %s519, 8
      %s521 = scalar_lea.vmem %s2, %s520
      %s522 = smul.u32 %s23, 4
      %s523 = sadd.s32 %s522, %s24
      %p524 = scmp.lt.s32.totalorder %s523, 2
      %s525 = scalar_select %p524, %s523, 2
      %s526 = smul.u32 16, %s525
      %s527 = ssub.s32 38, %s526
      %p528 = scmp.lt.s32.totalorder %s527, 16
      %s529 = scalar_select %p528, %s527, 16
      %s530 = smul.u32 128, %s529
      %s531 = smul.u32 %s23, 4
      %s532 = sadd.s32 %s531, %s24
      %s533 = ssub.s32 %s532, 3
      %p534 = scmp.gt.s32.totalorder %s533, 0
      %s535 = scalar_select %p534, %s533, 0
      %p536 = scmp.lt.s32.totalorder %s535, 3
      %s537 = scalar_select %p536, %s535, 3
      %s538 = smul.u32 16, %s537
      %s539 = ssub.s32 57, %s538
      %p540 = scmp.lt.s32.totalorder %s539, 16
      %s541 = scalar_select %p540, %s539, 16
      %s542 = smul.u32 128, %s541
      %p543 = scmp.lt.s32.totalorder %s538, 56
      %s544 = scalar_select %p543, %s538, 56
      %s545 = smul.addr %s544, 8
      %s546 = scalar_lea.vmem %s3, %s545
      %s547 = smul.u32 %s23, 4
      %s548 = sadd.s32 %s547, %s24
      %s549 = ssub.s32 %s548, 3
      %p550 = scmp.gt.s32.totalorder %s549, 0
      %s551 = scalar_select %p550, %s549, 0
      %p552 = scmp.lt.s32.totalorder %s551, 3
      %s553 = scalar_select %p552, %s551, 3
      %s554 = smul.u32 16, %s553
      %s555 = ssub.s32 57, %s554
      %p556 = scmp.lt.s32.totalorder %s555, 16
      %s557 = scalar_select %p556, %s555, 16
      %s558 = smul.u32 128, %s557
      %p559 = scmp.lt.s32.totalorder %s23, 1
      %s560 = scalar_select %p559, %s23, 1
      %s561 = smul.addr %s560, 2
      %s562 = smul.addr %s561, 8
      %s563 = scalar_lea.vmem %s8, %s562
      %s564 = smul.u32 %s23, 4
      %s565 = sadd.s32 %s564, %s24
      %p566 = scmp.eq.s32.totalorder %s24, 0
      // Predicated region
      $region53: #{ds_node_edge_readout.2} parent=51 // pred_check
        %p567 = pneg %p566
      $region54: #{ds_node_edge_readout.2} parent=51 // pred_check_branch
        %569 = sbr.rel (%p567) target = $region56
      $region55: #{ds_node_edge_readout.2} parent=51 // pred_region
        %vm570 = vcmask 269312
        %571 = vst.msk [vmem:[%s563] sm:$0xff] %vm570, 0.0
        %572 = vst.msk [vmem:[%s563 + $0x8] sm:$0xff] %vm570, 0.0
      $region56: #{ds_node_edge_readout.2} parent=51 // pred_fallthru
        _
      %p573 = scmp.lt.s32.totalorder %s565, 3
      // Predicated region
      $region57: #{ds_node_edge_readout.2} parent=51 // pred_check
        %p574 = pneg %p573
      $region58: #{ds_node_edge_readout.2} parent=51 // pred_check_branch
        %576 = sbr.rel (%p574) target = $region60
      $region59: #{ds_node_edge_readout.2} parent=51 // pred_region
        %v577 = vld [vmem:[%s521] sm:$0xff]
        %v578 = vld [vmem:[%s521 + $0x8] sm:$0xff]
        %v579 = vld [vmem:[%s521 + $0x10] sm:$0xff]
        %v580 = vld [vmem:[%s521 + $0x18] sm:$0xff]
        %v581 = vld [vmem:[%s521 + $0x20] sm:$0xff]
        %v582 = vld [vmem:[%s521 + $0x28] sm:$0xff]
        %v583 = vld [vmem:[%s521 + $0x30] sm:$0xff]
        %v584 = vld [vmem:[%s521 + $0x38] sm:$0xff]
        %v585 = vld [vmem:[%s521 + $0x40] sm:$0xff]
        %v586 = vld [vmem:[%s521 + $0x48] sm:$0xff]
        %v587 = vld [vmem:[%s521 + $0x50] sm:$0xff]
        %v588 = vld [vmem:[%s521 + $0x58] sm:$0xff]
        %v589 = vld [vmem:[%s521 + $0x60] sm:$0xff]
        %v590 = vld [vmem:[%s521 + $0x68] sm:$0xff]
        %v591 = vld [vmem:[%s521 + $0x70] sm:$0xff]
        %v592 = vld [vmem:[%s521 + $0x78] sm:$0xff]
        %v593 = vld [vmem:[%s487] sm:$0x1]
        %s594 = smul.u32 %s565, 128
        %v595 = vlaneseq
        %v596 = vshrl.u32 %v595, 7
        %v597 = vadd.s32 %v596, 8
        %v598 = vadd.s32 %v596, 16
        %v599 = vadd.s32 %v596, 24
        %v600 = vadd.s32 %v596, 32
        %v601 = vadd.s32 %v596, 40
        %v602 = vadd.s32 %v596, 48
        %v603 = vadd.s32 %v596, 56
        %v604 = vadd.s32 %v596, 64
        %v605 = vadd.s32 %v596, 72
        %v606 = vadd.s32 %v596, 80
        %v607 = vadd.s32 %v596, 88
        %v608 = vadd.s32 %v596, 96
        %v609 = vadd.s32 %v596, 104
        %v610 = vadd.s32 %v596, 112
        %v611 = vadd.s32 %v596, 120
        %v612 = vstv %s594
        %v613 = vadd.s32 %v596, %v612
        %v614 = vadd.s32 %v597, %v612
        %v615 = vadd.s32 %v598, %v612
        %v616 = vadd.s32 %v599, %v612
        %v617 = vadd.s32 %v600, %v612
        %v618 = vadd.s32 %v601, %v612
        %v619 = vadd.s32 %v602, %v612
        %v620 = vadd.s32 %v603, %v612
        %v621 = vadd.s32 %v604, %v612
        %v622 = vadd.s32 %v605, %v612
        %v623 = vadd.s32 %v606, %v612
        %v624 = vadd.s32 %v607, %v612
        %v625 = vadd.s32 %v608, %v612
        %v626 = vadd.s32 %v609, %v612
        %v627 = vadd.s32 %v610, %v612
        %v628 = vadd.s32 %v611, %v612
        %vm629 = vcmp.lt.s32.totalorder %v613, 300
        %vm630 = vcmp.lt.s32.totalorder %v614, 300
        %vm631 = vcmp.lt.s32.totalorder %v615, 300
        %vm632 = vcmp.lt.s32.totalorder %v616, 300
        %vm633 = vcmp.lt.s32.totalorder %v617, 300
        %vm634 = vcmp.lt.s32.totalorder %v618, 300
        %vm635 = vcmp.lt.s32.totalorder %v619, 300
        %vm636 = vcmp.lt.s32.totalorder %v620, 300
        %vm637 = vcmp.lt.s32.totalorder %v621, 300
        %vm638 = vcmp.lt.s32.totalorder %v622, 300
        %vm639 = vcmp.lt.s32.totalorder %v623, 300
        %vm640 = vcmp.lt.s32.totalorder %v624, 300
        %vm641 = vcmp.lt.s32.totalorder %v625, 300
        %vm642 = vcmp.lt.s32.totalorder %v626, 300
        %vm643 = vcmp.lt.s32.totalorder %v627, 300
        %vm644 = vcmp.lt.s32.totalorder %v628, 300
        %v645 = vlaneseq
        %v646 = vand.u32 %v645, 127
        %v647 = vadd.s32 %v646, %v612
        %vm648 = vcmp.lt.s32.totalorder %v647, 300
        %v649 = vsel %vm629, 1, 0
        %v650 = vsel %vm630, 1, 0
        %v651 = vsel %vm631, 1, 0
        %v652 = vsel %vm632, 1, 0
        %v653 = vsel %vm633, 1, 0
        %v654 = vsel %vm634, 1, 0
        %v655 = vsel %vm635, 1, 0
        %v656 = vsel %vm636, 1, 0
        %v657 = vsel %vm637, 1, 0
        %v658 = vsel %vm638, 1, 0
        %v659 = vsel %vm639, 1, 0
        %v660 = vsel %vm640, 1, 0
        %v661 = vsel %vm641, 1, 0
        %v662 = vsel %vm642, 1, 0
        %v663 = vsel %vm643, 1, 0
        %v664 = vsel %vm644, 1, 0
        %vm665 = vcmp.eq.s32.totalorder %v649, 1
        %vm666 = vcmp.eq.s32.totalorder %v650, 1
        %vm667 = vcmp.eq.s32.totalorder %v651, 1
        %vm668 = vcmp.eq.s32.totalorder %v652, 1
        %vm669 = vcmp.eq.s32.totalorder %v653, 1
        %vm670 = vcmp.eq.s32.totalorder %v654, 1
        %vm671 = vcmp.eq.s32.totalorder %v655, 1
        %vm672 = vcmp.eq.s32.totalorder %v656, 1
        %vm673 = vcmp.eq.s32.totalorder %v657, 1
        %vm674 = vcmp.eq.s32.totalorder %v658, 1
        %vm675 = vcmp.eq.s32.totalorder %v659, 1
        %vm676 = vcmp.eq.s32.totalorder %v660, 1
        %vm677 = vcmp.eq.s32.totalorder %v661, 1
        %vm678 = vcmp.eq.s32.totalorder %v662, 1
        %vm679 = vcmp.eq.s32.totalorder %v663, 1
        %vm680 = vcmp.eq.s32.totalorder %v664, 1
        %v681 = vsel %vm665, %v577, 0.0
        %v682 = vsel %vm666, %v578, 0.0
        %v683 = vsel %vm667, %v579, 0.0
        %v684 = vsel %vm668, %v580, 0.0
        %v685 = vsel %vm669, %v581, 0.0
        %v686 = vsel %vm670, %v582, 0.0
        %v687 = vsel %vm671, %v583, 0.0
        %v688 = vsel %vm672, %v584, 0.0
        %v689 = vsel %vm673, %v585, 0.0
        %v690 = vsel %vm674, %v586, 0.0
        %v691 = vsel %vm675, %v587, 0.0
        %v692 = vsel %vm676, %v588, 0.0
        %v693 = vsel %vm677, %v589, 0.0
        %v694 = vsel %vm678, %v590, 0.0
        %v695 = vsel %vm679, %v591, 0.0
        %v696 = vsel %vm680, %v592, 0.0
        %v697 = vld [vmem:[%s4] sm:$0xff]
        %v698 = vld [vmem:[%s4 + $0x8] sm:$0xff]
        %v699 = vld [vmem:[%s5] sm:$0x1]
        %v701 = vlaneseq
        %v702 = vshrl.u32 %v701, 7
        %v703 = vsub.s32 0, %v702
        %v704 = vrot.slane %v699, %v703
        %vm706 = vcmask 130048
        %v708 = vsel %vm706, %v681, 0
        %v711 = vsel %vm706, %v682, 0
        %v714 = vsel %vm706, %v683, 0
        %v717 = vsel %vm706, %v684, 0
        %v720 = vsel %vm706, %v685, 0
        %v723 = vsel %vm706, %v686, 0
        %v726 = vsel %vm706, %v687, 0
        %v729 = vsel %vm706, %v688, 0
        %v732 = vsel %vm706, %v689, 0
        %v735 = vsel %vm706, %v690, 0
        %v738 = vsel %vm706, %v691, 0
        %v741 = vsel %vm706, %v692, 0
        %v744 = vsel %vm706, %v693, 0
        %v747 = vsel %vm706, %v694, 0
        %v750 = vsel %vm706, %v695, 0
        %v753 = vsel %vm706, %v696, 0
        %755 = vmatprep.subr.mxu0 0.0
        %756 = vmatpush1.msra.mxu0 0.0
        %757 = vmatprep.subr.mxu0 0.0
        %758 = vmatpush1.msra.mxu0 0.0
        %759 = vmatprep.subr.mxu0 0.0
        %760 = vmatpush1.msra.mxu0 0.0
        %761 = vmatprep.subr.mxu0 0.0
        %762 = vmatpush1.msra.mxu0 0.0
        %763 = vmatprep.subr.mxu0 0.0
        %764 = vmatpush1.msra.mxu0 0.0
        %765 = vmatprep.subr.mxu0 0.0
        %766 = vmatpush1.msra.mxu0 0.0
        %767 = vmatprep.subr.mxu0 0.0
        %768 = vmatpush1.msra.mxu0 0.0
        %769 = vmatprep.subr.mxu0 0.0
        %770 = vmatpush1.msra.mxu0 0.0
        %771 = vmatprep.subr.mxu0 0.0
        %772 = vmatpush1.msra.mxu0 0.0
        %773 = vmatprep.subr.mxu0 0.0
        %774 = vmatpush1.msra.mxu0 0.0
        %775 = vmatprep.subr.mxu0 0.0
        %776 = vmatpush1.msra.mxu0 0.0
        %777 = vmatprep.subr.mxu0 0.0
        %778 = vmatpush1.msra.mxu0 0.0
        %779 = vmatprep.subr.mxu0 0.0
        %780 = vmatpush1.msra.mxu0 0.0
        %781 = vmatprep.subr.mxu0 0.0
        %782 = vmatpush1.msra.mxu0 0.0
        %783 = vmatprep.subr.mxu0 0.0
        %784 = vmatpush1.msra.mxu0 %v698
        %785 = vmatprep.subr.mxu0 0.0
        %786 = vmatpush1.msra.mxu0 %v697
        %787 = vmatprep.subr.mxu0 0.0
        %788 = vmatpush2.msra.mxu0 0.0
        %789 = vmatprep.subr.mxu0 0.0
        %790 = vmatpush2.msra.mxu0 0.0
        %791 = vmatprep.subr.mxu0 0.0
        %792 = vmatpush2.msra.mxu0 0.0
        %793 = vmatprep.subr.mxu0 0.0
        %794 = vmatpush2.msra.mxu0 0.0
        %795 = vmatprep.subr.mxu0 0.0
        %796 = vmatpush2.msra.mxu0 0.0
        %797 = vmatprep.subr.mxu0 0.0
        %798 = vmatpush2.msra.mxu0 0.0
        %799 = vmatprep.subr.mxu0 0.0
        %800 = vmatpush2.msra.mxu0 0.0
        %801 = vmatprep.subr.mxu0 0.0
        %802 = vmatpush2.msra.mxu0 0.0
        %803 = vmatprep.subr.mxu0 0.0
        %804 = vmatpush2.msra.mxu0 0.0
        %805 = vmatprep.subr.mxu0 0.0
        %806 = vmatpush2.msra.mxu0 0.0
        %807 = vmatprep.subr.mxu0 0.0
        %808 = vmatpush2.msra.mxu0 0.0
        %809 = vmatprep.subr.mxu0 0.0
        %810 = vmatpush2.msra.mxu0 0.0
        %811 = vmatprep.subr.mxu0 0.0
        %812 = vmatpush2.msra.mxu0 0.0
        %813 = vmatprep.subr.mxu0 0.0
        %814 = vmatpush2.msra.mxu0 0.0
        %815 = vmatprep.subr.mxu0 0.0
        %816 = vmatpush2.msra.mxu0 0.0
        %817 = vmatprep.subr.mxu0 0.0
        %818 = vmatpush2.msra.mxu0 0.0
        %819 = vmatprep.mubr.f32.mxu0 0.0
        %820 = vmatmul.mubr.f32.gmra.mxu0 %v708
        %v821 = vpop.f32.mrf.mxu0
        %v822 = vadd.f32 %v704, %v821
        %v823 = vpop.f32.mrf.mxu0
        %824 = vmatprep.mubr.f32.mxu0 0.0
        %825 = vmatmul.mubr.f32.gmra.mxu0 %v711
        %v826 = vpop.f32.mrf.mxu0
        %v827 = vadd.f32 %v704, %v826
        %v828 = vpop.f32.mrf.mxu0
        %829 = vmatprep.mubr.f32.mxu0 0.0
        %830 = vmatmul.mubr.f32.gmra.mxu0 %v714
        %v831 = vpop.f32.mrf.mxu0
        %v832 = vadd.f32 %v704, %v831
        %v833 = vpop.f32.mrf.mxu0
        %834 = vmatprep.mubr.f32.mxu0 0.0
        %835 = vmatmul.mubr.f32.gmra.mxu0 %v717
        %v836 = vpop.f32.mrf.mxu0
        %v837 = vadd.f32 %v704, %v836
        %v838 = vpop.f32.mrf.mxu0
        %839 = vmatprep.mubr.f32.mxu0 0.0
        %840 = vmatmul.mubr.f32.gmra.mxu0 %v720
        %v841 = vpop.f32.mrf.mxu0
        %v842 = vadd.f32 %v704, %v841
        %v843 = vpop.f32.mrf.mxu0
        %844 = vmatprep.mubr.f32.mxu0 0.0
        %845 = vmatmul.mubr.f32.gmra.mxu0 %v723
        %v846 = vpop.f32.mrf.mxu0
        %v847 = vadd.f32 %v704, %v846
        %v848 = vpop.f32.mrf.mxu0
        %849 = vmatprep.mubr.f32.mxu0 0.0
        %850 = vmatmul.mubr.f32.gmra.mxu0 %v726
        %v851 = vpop.f32.mrf.mxu0
        %v852 = vadd.f32 %v704, %v851
        %v853 = vpop.f32.mrf.mxu0
        %854 = vmatprep.mubr.f32.mxu0 0.0
        %855 = vmatmul.mubr.f32.gmra.mxu0 %v729
        %v856 = vpop.f32.mrf.mxu0
        %v857 = vadd.f32 %v704, %v856
        %v858 = vpop.f32.mrf.mxu0
        %859 = vmatprep.mubr.f32.mxu0 0.0
        %860 = vmatmul.mubr.f32.gmra.mxu0 %v732
        %v861 = vpop.f32.mrf.mxu0
        %v862 = vadd.f32 %v704, %v861
        %v863 = vpop.f32.mrf.mxu0
        %864 = vmatprep.mubr.f32.mxu0 0.0
        %865 = vmatmul.mubr.f32.gmra.mxu0 %v735
        %v866 = vpop.f32.mrf.mxu0
        %v867 = vadd.f32 %v704, %v866
        %v868 = vpop.f32.mrf.mxu0
        %869 = vmatprep.mubr.f32.mxu0 0.0
        %870 = vmatmul.mubr.f32.gmra.mxu0 %v738
        %v871 = vpop.f32.mrf.mxu0
        %v872 = vadd.f32 %v704, %v871
        %v873 = vpop.f32.mrf.mxu0
        %874 = vmatprep.mubr.f32.mxu0 0.0
        %875 = vmatmul.mubr.f32.gmra.mxu0 %v741
        %v876 = vpop.f32.mrf.mxu0
        %v877 = vadd.f32 %v704, %v876
        %v878 = vpop.f32.mrf.mxu0
        %879 = vmatprep.mubr.f32.mxu0 0.0
        %880 = vmatmul.mubr.f32.gmra.mxu0 %v744
        %v881 = vpop.f32.mrf.mxu0
        %v882 = vadd.f32 %v704, %v881
        %v883 = vpop.f32.mrf.mxu0
        %884 = vmatprep.mubr.f32.mxu0 0.0
        %885 = vmatmul.mubr.f32.gmra.mxu0 %v747
        %v886 = vpop.f32.mrf.mxu0
        %v887 = vadd.f32 %v704, %v886
        %v888 = vpop.f32.mrf.mxu0
        %889 = vmatprep.mubr.f32.mxu0 0.0
        %890 = vmatmul.mubr.f32.gmra.mxu0 %v750
        %v891 = vpop.f32.mrf.mxu0
        %v892 = vadd.f32 %v704, %v891
        %v893 = vpop.f32.mrf.mxu0
        %894 = vmatprep.mubr.f32.mxu0 0.0
        %895 = vmatmul.mubr.f32.gmra.mxu0 %v753
        %v896 = vpop.f32.mrf.mxu0
        %v897 = vadd.f32 %v704, %v896
        %v898 = vpop.f32.mrf.mxu0
        %899 = vdwg.mxu0
        %v900 = vmax.f32 %v822, 0.0
        %v901 = vmax.f32 %v827, 0.0
        %v902 = vmax.f32 %v832, 0.0
        %v903 = vmax.f32 %v837, 0.0
        %v904 = vmax.f32 %v842, 0.0
        %v905 = vmax.f32 %v847, 0.0
        %v906 = vmax.f32 %v852, 0.0
        %v907 = vmax.f32 %v857, 0.0
        %v908 = vmax.f32 %v862, 0.0
        %v909 = vmax.f32 %v867, 0.0
        %v910 = vmax.f32 %v872, 0.0
        %v911 = vmax.f32 %v877, 0.0
        %v912 = vmax.f32 %v882, 0.0
        %v913 = vmax.f32 %v887, 0.0
        %v914 = vmax.f32 %v892, 0.0
        %v915 = vmax.f32 %v897, 0.0
        %v916 = vlaneseq
        %v917 = vshrl.u32 %v916, 7
        %v918 = vsub.s32 0, %v917
        %v919 = vrot.slane %v593, %v918
        %vm920 = vcmp.eq.s32.totalorder %v596, %v919
        %v921 = vsel %vm648, 1, 0
        %vm922 = vcmp.eq.s32.totalorder %v921, 1
        %vm923 = vmand %vm920, %vm922
        %v924 = vsel %vm923, 1, 0
        %v925 = vcvt.s32.f32 %v924
        %v926 = vld [vmem:[%s563] sm:$0xff]
        %927 = vmatprep.subr.mxu0 0.0
        %928 = vmatpush1.msra.mxu0 %v915
        %929 = vmatprep.subr.mxu0 0.0
        %930 = vmatpush1.msra.mxu0 %v914
        %931 = vmatprep.subr.mxu0 0.0
        %932 = vmatpush1.msra.mxu0 %v913
        %933 = vmatprep.subr.mxu0 0.0
        %934 = vmatpush1.msra.mxu0 %v912
        %935 = vmatprep.subr.mxu0 0.0
        %936 = vmatpush1.msra.mxu0 %v911
        %937 = vmatprep.subr.mxu0 0.0
        %938 = vmatpush1.msra.mxu0 %v910
        %939 = vmatprep.subr.mxu0 0.0
        %940 = vmatpush1.msra.mxu0 %v909
        %941 = vmatprep.subr.mxu0 0.0
        %942 = vmatpush1.msra.mxu0 %v908
        %943 = vmatprep.subr.mxu0 0.0
        %944 = vmatpush1.msra.mxu0 %v907
        %945 = vmatprep.subr.mxu0 0.0
        %946 = vmatpush1.msra.mxu0 %v906
        %947 = vmatprep.subr.mxu0 0.0
        %948 = vmatpush1.msra.mxu0 %v905
        %949 = vmatprep.subr.mxu0 0.0
        %950 = vmatpush1.msra.mxu0 %v904
        %951 = vmatprep.subr.mxu0 0.0
        %952 = vmatpush1.msra.mxu0 %v903
        %953 = vmatprep.subr.mxu0 0.0
        %954 = vmatpush1.msra.mxu0 %v902
        %955 = vmatprep.subr.mxu0 0.0
        %956 = vmatpush1.msra.mxu0 %v901
        %957 = vmatprep.subr.mxu0 0.0
        %958 = vmatpush1.msra.mxu0 %v900
        %959 = vmatprep.subr.mxu0 0.0
        %960 = vmatpush2.msra.mxu0 0.0
        %961 = vmatprep.subr.mxu0 0.0
        %962 = vmatpush2.msra.mxu0 0.0
        %963 = vmatprep.subr.mxu0 0.0
        %964 = vmatpush2.msra.mxu0 0.0
        %965 = vmatprep.subr.mxu0 0.0
        %966 = vmatpush2.msra.mxu0 0.0
        %967 = vmatprep.subr.mxu0 0.0
        %968 = vmatpush2.msra.mxu0 0.0
        %969 = vmatprep.subr.mxu0 0.0
        %970 = vmatpush2.msra.mxu0 0.0
        %971 = vmatprep.subr.mxu0 0.0
        %972 = vmatpush2.msra.mxu0 0.0
        %973 = vmatprep.subr.mxu0 0.0
        %974 = vmatpush2.msra.mxu0 0.0
        %975 = vmatprep.subr.mxu0 0.0
        %976 = vmatpush2.msra.mxu0 0.0
        %977 = vmatprep.subr.mxu0 0.0
        %978 = vmatpush2.msra.mxu0 0.0
        %979 = vmatprep.subr.mxu0 0.0
        %980 = vmatpush2.msra.mxu0 0.0
        %981 = vmatprep.subr.mxu0 0.0
        %982 = vmatpush2.msra.mxu0 0.0
        %983 = vmatprep.subr.mxu0 0.0
        %984 = vmatpush2.msra.mxu0 0.0
        %985 = vmatprep.subr.mxu0 0.0
        %986 = vmatpush2.msra.mxu0 0.0
        %987 = vmatprep.subr.mxu0 0.0
        %988 = vmatpush2.msra.mxu0 0.0
        %989 = vmatprep.subr.mxu0 0.0
        %990 = vmatpush2.msra.mxu0 0.0
        %991 = vmatprep.mubr.f32.mxu0 0.0
        %992 = vmatmul.mubr.f32.gmra.mxu0 %v925
        %v993 = vpop.f32.mrf.mxu0
        %v994 = vadd.f32 0.0, %v993
        %v995 = vpop.f32.mrf.mxu0
        %996 = vdwg.mxu0
        %v997 = vadd.f32 %v926, %v994
        %vm998 = vcmask 269312
        %999 = vst.msk [vmem:[%s563] sm:$0xff] %vm998, %v997
      $region60: #{ds_node_edge_readout.2} parent=51 // pred_fallthru
        _
      %p1000 = scmp.ge.s32.totalorder %s565, 3
      // Predicated region
      $region61: #{ds_node_edge_readout.2} parent=51 // pred_check
        %p1001 = pneg %p1000
      $region62: #{ds_node_edge_readout.2} parent=51 // pred_check_branch
        %1003 = sbr.rel (%p1001) target = $region64
      $region63: #{ds_node_edge_readout.2} parent=51 // pred_region
        %v1004 = vld [vmem:[%s546] sm:$0xff]
        %v1005 = vld [vmem:[%s546 + $0x8] sm:$0xff]
        %v1006 = vld [vmem:[%s546 + $0x10] sm:$0xff]
        %v1007 = vld [vmem:[%s546 + $0x18] sm:$0xff]
        %v1008 = vld [vmem:[%s546 + $0x20] sm:$0xff]
        %v1009 = vld [vmem:[%s546 + $0x28] sm:$0xff]
        %v1010 = vld [vmem:[%s546 + $0x30] sm:$0xff]
        %v1011 = vld [vmem:[%s546 + $0x38] sm:$0xff]
        %v1012 = vld [vmem:[%s546 + $0x40] sm:$0xff]
        %v1013 = vld [vmem:[%s546 + $0x48] sm:$0xff]
        %v1014 = vld [vmem:[%s546 + $0x50] sm:$0xff]
        %v1015 = vld [vmem:[%s546 + $0x58] sm:$0xff]
        %v1016 = vld [vmem:[%s546 + $0x60] sm:$0xff]
        %v1017 = vld [vmem:[%s546 + $0x68] sm:$0xff]
        %v1018 = vld [vmem:[%s546 + $0x70] sm:$0xff]
        %v1019 = vld [vmem:[%s546 + $0x78] sm:$0xff]
        %v1020 = vld [vmem:[%s501] sm:$0x1]
        %s1021 = ssub.s32 %s565, 3
        %s1022 = smul.u32 %s1021, 128
        %v1023 = vlaneseq
        %v1024 = vshrl.u32 %v1023, 7
        %v1025 = vadd.s32 %v1024, 8
        %v1026 = vadd.s32 %v1024, 16
        %v1027 = vadd.s32 %v1024, 24
        %v1028 = vadd.s32 %v1024, 32
        %v1029 = vadd.s32 %v1024, 40
        %v1030 = vadd.s32 %v1024, 48
        %v1031 = vadd.s32 %v1024, 56
        %v1032 = vadd.s32 %v1024, 64
        %v1033 = vadd.s32 %v1024, 72
        %v1034 = vadd.s32 %v1024, 80
        %v1035 = vadd.s32 %v1024, 88
        %v1036 = vadd.s32 %v1024, 96
        %v1037 = vadd.s32 %v1024, 104
        %v1038 = vadd.s32 %v1024, 112
        %v1039 = vadd.s32 %v1024, 120
        %v1040 = vstv %s1022
        %v1041 = vadd.s32 %v1024, %v1040
        %v1042 = vadd.s32 %v1025, %v1040
        %v1043 = vadd.s32 %v1026, %v1040
        %v1044 = vadd.s32 %v1027, %v1040
        %v1045 = vadd.s32 %v1028, %v1040
        %v1046 = vadd.s32 %v1029, %v1040
        %v1047 = vadd.s32 %v1030, %v1040
        %v1048 = vadd.s32 %v1031, %v1040
        %v1049 = vadd.s32 %v1032, %v1040
        %v1050 = vadd.s32 %v1033, %v1040
        %v1051 = vadd.s32 %v1034, %v1040
        %v1052 = vadd.s32 %v1035, %v1040
        %v1053 = vadd.s32 %v1036, %v1040
        %v1054 = vadd.s32 %v1037, %v1040
        %v1055 = vadd.s32 %v1038, %v1040
        %v1056 = vadd.s32 %v1039, %v1040
        %vm1057 = vcmp.lt.s32.totalorder %v1041, 452
        %vm1058 = vcmp.lt.s32.totalorder %v1042, 452
        %vm1059 = vcmp.lt.s32.totalorder %v1043, 452
        %vm1060 = vcmp.lt.s32.totalorder %v1044, 452
        %vm1061 = vcmp.lt.s32.totalorder %v1045, 452
        %vm1062 = vcmp.lt.s32.totalorder %v1046, 452
        %vm1063 = vcmp.lt.s32.totalorder %v1047, 452
        %vm1064 = vcmp.lt.s32.totalorder %v1048, 452
        %vm1065 = vcmp.lt.s32.totalorder %v1049, 452
        %vm1066 = vcmp.lt.s32.totalorder %v1050, 452
        %vm1067 = vcmp.lt.s32.totalorder %v1051, 452
        %vm1068 = vcmp.lt.s32.totalorder %v1052, 452
        %vm1069 = vcmp.lt.s32.totalorder %v1053, 452
        %vm1070 = vcmp.lt.s32.totalorder %v1054, 452
        %vm1071 = vcmp.lt.s32.totalorder %v1055, 452
        %vm1072 = vcmp.lt.s32.totalorder %v1056, 452
        %v1073 = vlaneseq
        %v1074 = vand.u32 %v1073, 127
        %v1075 = vadd.s32 %v1074, %v1040
        %vm1076 = vcmp.lt.s32.totalorder %v1075, 452
        %v1077 = vsel %vm1057, 1, 0
        %v1078 = vsel %vm1058, 1, 0
        %v1079 = vsel %vm1059, 1, 0
        %v1080 = vsel %vm1060, 1, 0
        %v1081 = vsel %vm1061, 1, 0
        %v1082 = vsel %vm1062, 1, 0
        %v1083 = vsel %vm1063, 1, 0
        %v1084 = vsel %vm1064, 1, 0
        %v1085 = vsel %vm1065, 1, 0
        %v1086 = vsel %vm1066, 1, 0
        %v1087 = vsel %vm1067, 1, 0
        %v1088 = vsel %vm1068, 1, 0
        %v1089 = vsel %vm1069, 1, 0
        %v1090 = vsel %vm1070, 1, 0
        %v1091 = vsel %vm1071, 1, 0
        %v1092 = vsel %vm1072, 1, 0
        %vm1093 = vcmp.eq.s32.totalorder %v1077, 1
        %vm1094 = vcmp.eq.s32.totalorder %v1078, 1
        %vm1095 = vcmp.eq.s32.totalorder %v1079, 1
        %vm1096 = vcmp.eq.s32.totalorder %v1080, 1
        %vm1097 = vcmp.eq.s32.totalorder %v1081, 1
        %vm1098 = vcmp.eq.s32.totalorder %v1082, 1
        %vm1099 = vcmp.eq.s32.totalorder %v1083, 1
        %vm1100 = vcmp.eq.s32.totalorder %v1084, 1
        %vm1101 = vcmp.eq.s32.totalorder %v1085, 1
        %vm1102 = vcmp.eq.s32.totalorder %v1086, 1
        %vm1103 = vcmp.eq.s32.totalorder %v1087, 1
        %vm1104 = vcmp.eq.s32.totalorder %v1088, 1
        %vm1105 = vcmp.eq.s32.totalorder %v1089, 1
        %vm1106 = vcmp.eq.s32.totalorder %v1090, 1
        %vm1107 = vcmp.eq.s32.totalorder %v1091, 1
        %vm1108 = vcmp.eq.s32.totalorder %v1092, 1
        %v1109 = vsel %vm1093, %v1004, 0.0
        %v1110 = vsel %vm1094, %v1005, 0.0
        %v1111 = vsel %vm1095, %v1006, 0.0
        %v1112 = vsel %vm1096, %v1007, 0.0
        %v1113 = vsel %vm1097, %v1008, 0.0
        %v1114 = vsel %vm1098, %v1009, 0.0
        %v1115 = vsel %vm1099, %v1010, 0.0
        %v1116 = vsel %vm1100, %v1011, 0.0
        %v1117 = vsel %vm1101, %v1012, 0.0
        %v1118 = vsel %vm1102, %v1013, 0.0
        %v1119 = vsel %vm1103, %v1014, 0.0
        %v1120 = vsel %vm1104, %v1015, 0.0
        %v1121 = vsel %vm1105, %v1016, 0.0
        %v1122 = vsel %vm1106, %v1017, 0.0
        %v1123 = vsel %vm1107, %v1018, 0.0
        %v1124 = vsel %vm1108, %v1019, 0.0
        %v1125 = vld [vmem:[%s6] sm:$0xff]
        %v1126 = vld [vmem:[%s6 + $0x8] sm:$0xff]
        %v1127 = vld [vmem:[%s7] sm:$0x1]
        %v1129 = vlaneseq
        %v1130 = vshrl.u32 %v1129, 7
        %v1131 = vsub.s32 0, %v1130
        %v1132 = vrot.slane %v1127, %v1131
        %vm1134 = vcmask 130048
        %v1136 = vsel %vm1134, %v1109, 0
        %v1139 = vsel %vm1134, %v1110, 0
        %v1142 = vsel %vm1134, %v1111, 0
        %v1145 = vsel %vm1134, %v1112, 0
        %v1148 = vsel %vm1134, %v1113, 0
        %v1151 = vsel %vm1134, %v1114, 0
        %v1154 = vsel %vm1134, %v1115, 0
        %v1157 = vsel %vm1134, %v1116, 0
        %v1160 = vsel %vm1134, %v1117, 0
        %v1163 = vsel %vm1134, %v1118, 0
        %v1166 = vsel %vm1134, %v1119, 0
        %v1169 = vsel %vm1134, %v1120, 0
        %v1172 = vsel %vm1134, %v1121, 0
        %v1175 = vsel %vm1134, %v1122, 0
        %v1178 = vsel %vm1134, %v1123, 0
        %v1181 = vsel %vm1134, %v1124, 0
        %1183 = vmatprep.subr.mxu0 0.0
        %1184 = vmatpush1.msra.mxu0 0.0
        %1185 = vmatprep.subr.mxu0 0.0
        %1186 = vmatpush1.msra.mxu0 0.0
        %1187 = vmatprep.subr.mxu0 0.0
        %1188 = vmatpush1.msra.mxu0 0.0
        %1189 = vmatprep.subr.mxu0 0.0
        %1190 = vmatpush1.msra.mxu0 0.0
        %1191 = vmatprep.subr.mxu0 0.0
        %1192 = vmatpush1.msra.mxu0 0.0
        %1193 = vmatprep.subr.mxu0 0.0
        %1194 = vmatpush1.msra.mxu0 0.0
        %1195 = vmatprep.subr.mxu0 0.0
        %1196 = vmatpush1.msra.mxu0 0.0
        %1197 = vmatprep.subr.mxu0 0.0
        %1198 = vmatpush1.msra.mxu0 0.0
        %1199 = vmatprep.subr.mxu0 0.0
        %1200 = vmatpush1.msra.mxu0 0.0
        %1201 = vmatprep.subr.mxu0 0.0
        %1202 = vmatpush1.msra.mxu0 0.0
        %1203 = vmatprep.subr.mxu0 0.0
        %1204 = vmatpush1.msra.mxu0 0.0
        %1205 = vmatprep.subr.mxu0 0.0
        %1206 = vmatpush1.msra.mxu0 0.0
        %1207 = vmatprep.subr.mxu0 0.0
        %1208 = vmatpush1.msra.mxu0 0.0
        %1209 = vmatprep.subr.mxu0 0.0
        %1210 = vmatpush1.msra.mxu0 0.0
        %1211 = vmatprep.subr.mxu0 0.0
        %1212 = vmatpush1.msra.mxu0 %v1126
        %1213 = vmatprep.subr.mxu0 0.0
        %1214 = vmatpush1.msra.mxu0 %v1125
        %1215 = vmatprep.subr.mxu0 0.0
        %1216 = vmatpush2.msra.mxu0 0.0
        %1217 = vmatprep.subr.mxu0 0.0
        %1218 = vmatpush2.msra.mxu0 0.0
        %1219 = vmatprep.subr.mxu0 0.0
        %1220 = vmatpush2.msra.mxu0 0.0
        %1221 = vmatprep.subr.mxu0 0.0
        %1222 = vmatpush2.msra.mxu0 0.0
        %1223 = vmatprep.subr.mxu0 0.0
        %1224 = vmatpush2.msra.mxu0 0.0
        %1225 = vmatprep.subr.mxu0 0.0
        %1226 = vmatpush2.msra.mxu0 0.0
        %1227 = vmatprep.subr.mxu0 0.0
        %1228 = vmatpush2.msra.mxu0 0.0
        %1229 = vmatprep.subr.mxu0 0.0
        %1230 = vmatpush2.msra.mxu0 0.0
        %1231 = vmatprep.subr.mxu0 0.0
        %1232 = vmatpush2.msra.mxu0 0.0
        %1233 = vmatprep.subr.mxu0 0.0
        %1234 = vmatpush2.msra.mxu0 0.0
        %1235 = vmatprep.subr.mxu0 0.0
        %1236 = vmatpush2.msra.mxu0 0.0
        %1237 = vmatprep.subr.mxu0 0.0
        %1238 = vmatpush2.msra.mxu0 0.0
        %1239 = vmatprep.subr.mxu0 0.0
        %1240 = vmatpush2.msra.mxu0 0.0
        %1241 = vmatprep.subr.mxu0 0.0
        %1242 = vmatpush2.msra.mxu0 0.0
        %1243 = vmatprep.subr.mxu0 0.0
        %1244 = vmatpush2.msra.mxu0 0.0
        %1245 = vmatprep.subr.mxu0 0.0
        %1246 = vmatpush2.msra.mxu0 0.0
        %1247 = vmatprep.mubr.f32.mxu0 0.0
        %1248 = vmatmul.mubr.f32.gmra.mxu0 %v1136
        %v1249 = vpop.f32.mrf.mxu0
        %v1250 = vadd.f32 %v1132, %v1249
        %v1251 = vpop.f32.mrf.mxu0
        %1252 = vmatprep.mubr.f32.mxu0 0.0
        %1253 = vmatmul.mubr.f32.gmra.mxu0 %v1139
        %v1254 = vpop.f32.mrf.mxu0
        %v1255 = vadd.f32 %v1132, %v1254
        %v1256 = vpop.f32.mrf.mxu0
        %1257 = vmatprep.mubr.f32.mxu0 0.0
        %1258 = vmatmul.mubr.f32.gmra.mxu0 %v1142
        %v1259 = vpop.f32.mrf.mxu0
        %v1260 = vadd.f32 %v1132, %v1259
        %v1261 = vpop.f32.mrf.mxu0
        %1262 = vmatprep.mubr.f32.mxu0 0.0
        %1263 = vmatmul.mubr.f32.gmra.mxu0 %v1145
        %v1264 = vpop.f32.mrf.mxu0
        %v1265 = vadd.f32 %v1132, %v1264
        %v1266 = vpop.f32.mrf.mxu0
        %1267 = vmatprep.mubr.f32.mxu0 0.0
        %1268 = vmatmul.mubr.f32.gmra.mxu0 %v1148
        %v1269 = vpop.f32.mrf.mxu0
        %v1270 = vadd.f32 %v1132, %v1269
        %v1271 = vpop.f32.mrf.mxu0
        %1272 = vmatprep.mubr.f32.mxu0 0.0
        %1273 = vmatmul.mubr.f32.gmra.mxu0 %v1151
        %v1274 = vpop.f32.mrf.mxu0
        %v1275 = vadd.f32 %v1132, %v1274
        %v1276 = vpop.f32.mrf.mxu0
        %1277 = vmatprep.mubr.f32.mxu0 0.0
        %1278 = vmatmul.mubr.f32.gmra.mxu0 %v1154
        %v1279 = vpop.f32.mrf.mxu0
        %v1280 = vadd.f32 %v1132, %v1279
        %v1281 = vpop.f32.mrf.mxu0
        %1282 = vmatprep.mubr.f32.mxu0 0.0
        %1283 = vmatmul.mubr.f32.gmra.mxu0 %v1157
        %v1284 = vpop.f32.mrf.mxu0
        %v1285 = vadd.f32 %v1132, %v1284
        %v1286 = vpop.f32.mrf.mxu0
        %1287 = vmatprep.mubr.f32.mxu0 0.0
        %1288 = vmatmul.mubr.f32.gmra.mxu0 %v1160
        %v1289 = vpop.f32.mrf.mxu0
        %v1290 = vadd.f32 %v1132, %v1289
        %v1291 = vpop.f32.mrf.mxu0
        %1292 = vmatprep.mubr.f32.mxu0 0.0
        %1293 = vmatmul.mubr.f32.gmra.mxu0 %v1163
        %v1294 = vpop.f32.mrf.mxu0
        %v1295 = vadd.f32 %v1132, %v1294
        %v1296 = vpop.f32.mrf.mxu0
        %1297 = vmatprep.mubr.f32.mxu0 0.0
        %1298 = vmatmul.mubr.f32.gmra.mxu0 %v1166
        %v1299 = vpop.f32.mrf.mxu0
        %v1300 = vadd.f32 %v1132, %v1299
        %v1301 = vpop.f32.mrf.mxu0
        %1302 = vmatprep.mubr.f32.mxu0 0.0
        %1303 = vmatmul.mubr.f32.gmra.mxu0 %v1169
        %v1304 = vpop.f32.mrf.mxu0
        %v1305 = vadd.f32 %v1132, %v1304
        %v1306 = vpop.f32.mrf.mxu0
        %1307 = vmatprep.mubr.f32.mxu0 0.0
        %1308 = vmatmul.mubr.f32.gmra.mxu0 %v1172
        %v1309 = vpop.f32.mrf.mxu0
        %v1310 = vadd.f32 %v1132, %v1309
        %v1311 = vpop.f32.mrf.mxu0
        %1312 = vmatprep.mubr.f32.mxu0 0.0
        %1313 = vmatmul.mubr.f32.gmra.mxu0 %v1175
        %v1314 = vpop.f32.mrf.mxu0
        %v1315 = vadd.f32 %v1132, %v1314
        %v1316 = vpop.f32.mrf.mxu0
        %1317 = vmatprep.mubr.f32.mxu0 0.0
        %1318 = vmatmul.mubr.f32.gmra.mxu0 %v1178
        %v1319 = vpop.f32.mrf.mxu0
        %v1320 = vadd.f32 %v1132, %v1319
        %v1321 = vpop.f32.mrf.mxu0
        %1322 = vmatprep.mubr.f32.mxu0 0.0
        %1323 = vmatmul.mubr.f32.gmra.mxu0 %v1181
        %v1324 = vpop.f32.mrf.mxu0
        %v1325 = vadd.f32 %v1132, %v1324
        %v1326 = vpop.f32.mrf.mxu0
        %1327 = vdwg.mxu0
        %v1328 = vmax.f32 %v1250, 0.0
        %v1329 = vmax.f32 %v1255, 0.0
        %v1330 = vmax.f32 %v1260, 0.0
        %v1331 = vmax.f32 %v1265, 0.0
        %v1332 = vmax.f32 %v1270, 0.0
        %v1333 = vmax.f32 %v1275, 0.0
        %v1334 = vmax.f32 %v1280, 0.0
        %v1335 = vmax.f32 %v1285, 0.0
        %v1336 = vmax.f32 %v1290, 0.0
        %v1337 = vmax.f32 %v1295, 0.0
        %v1338 = vmax.f32 %v1300, 0.0
        %v1339 = vmax.f32 %v1305, 0.0
        %v1340 = vmax.f32 %v1310, 0.0
        %v1341 = vmax.f32 %v1315, 0.0
        %v1342 = vmax.f32 %v1320, 0.0
        %v1343 = vmax.f32 %v1325, 0.0
        %v1344 = vlaneseq
        %v1345 = vshrl.u32 %v1344, 7
        %v1346 = vsub.s32 0, %v1345
        %v1347 = vrot.slane %v1020, %v1346
        %vm1348 = vcmp.eq.s32.totalorder %v1024, %v1347
        %v1349 = vsel %vm1076, 1, 0
        %vm1350 = vcmp.eq.s32.totalorder %v1349, 1
        %vm1351 = vmand %vm1348, %vm1350
        %v1352 = vsel %vm1351, 1, 0
        %v1353 = vcvt.s32.f32 %v1352
        %s1354 = scalar_lea.vmem %s563, 8
        %v1355 = vld [vmem:[%s1354] sm:$0xff]
        %1356 = vmatprep.subr.mxu0 0.0
        %1357 = vmatpush1.msra.mxu0 %v1343
        %1358 = vmatprep.subr.mxu0 0.0
        %1359 = vmatpush1.msra.mxu0 %v1342
        %1360 = vmatprep.subr.mxu0 0.0
        %1361 = vmatpush1.msra.mxu0 %v1341
        %1362 = vmatprep.subr.mxu0 0.0
        %1363 = vmatpush1.msra.mxu0 %v1340
        %1364 = vmatprep.subr.mxu0 0.0
        %1365 = vmatpush1.msra.mxu0 %v1339
        %1366 = vmatprep.subr.mxu0 0.0
        %1367 = vmatpush1.msra.mxu0 %v1338
        %1368 = vmatprep.subr.mxu0 0.0
        %1369 = vmatpush1.msra.mxu0 %v1337
        %1370 = vmatprep.subr.mxu0 0.0
        %1371 = vmatpush1.msra.mxu0 %v1336
        %1372 = vmatprep.subr.mxu0 0.0
        %1373 = vmatpush1.msra.mxu0 %v1335
        %1374 = vmatprep.subr.mxu0 0.0
        %1375 = vmatpush1.msra.mxu0 %v1334
        %1376 = vmatprep.subr.mxu0 0.0
        %1377 = vmatpush1.msra.mxu0 %v1333
        %1378 = vmatprep.subr.mxu0 0.0
        %1379 = vmatpush1.msra.mxu0 %v1332
        %1380 = vmatprep.subr.mxu0 0.0
        %1381 = vmatpush1.msra.mxu0 %v1331
        %1382 = vmatprep.subr.mxu0 0.0
        %1383 = vmatpush1.msra.mxu0 %v1330
        %1384 = vmatprep.subr.mxu0 0.0
        %1385 = vmatpush1.msra.mxu0 %v1329
        %1386 = vmatprep.subr.mxu0 0.0
        %1387 = vmatpush1.msra.mxu0 %v1328
        %1388 = vmatprep.subr.mxu0 0.0
        %1389 = vmatpush2.msra.mxu0 0.0
        %1390 = vmatprep.subr.mxu0 0.0
        %1391 = vmatpush2.msra.mxu0 0.0
        %1392 = vmatprep.subr.mxu0 0.0
        %1393 = vmatpush2.msra.mxu0 0.0
        %1394 = vmatprep.subr.mxu0 0.0
        %1395 = vmatpush2.msra.mxu0 0.0
        %1396 = vmatprep.subr.mxu0 0.0
        %1397 = vmatpush2.msra.mxu0 0.0
        %1398 = vmatprep.subr.mxu0 0.0
        %1399 = vmatpush2.msra.mxu0 0.0
        %1400 = vmatprep.subr.mxu0 0.0
        %1401 = vmatpush2.msra.mxu0 0.0
        %1402 = vmatprep.subr.mxu0 0.0
        %1403 = vmatpush2.msra.mxu0 0.0
        %1404 = vmatprep.subr.mxu0 0.0
        %1405 = vmatpush2.msra.mxu0 0.0
        %1406 = vmatprep.subr.mxu0 0.0
        %1407 = vmatpush2.msra.mxu0 0.0
        %1408 = vmatprep.subr.mxu0 0.0
        %1409 = vmatpush2.msra.mxu0 0.0
        %1410 = vmatprep.subr.mxu0 0.0
        %1411 = vmatpush2.msra.mxu0 0.0
        %1412 = vmatprep.subr.mxu0 0.0
        %1413 = vmatpush2.msra.mxu0 0.0
        %1414 = vmatprep.subr.mxu0 0.0
        %1415 = vmatpush2.msra.mxu0 0.0
        %1416 = vmatprep.subr.mxu0 0.0
        %1417 = vmatpush2.msra.mxu0 0.0
        %1418 = vmatprep.subr.mxu0 0.0
        %1419 = vmatpush2.msra.mxu0 0.0
        %1420 = vmatprep.mubr.f32.mxu0 0.0
        %1421 = vmatmul.mubr.f32.gmra.mxu0 %v1353
        %v1422 = vpop.f32.mrf.mxu0
        %v1423 = vadd.f32 0.0, %v1422
        %v1424 = vpop.f32.mrf.mxu0
        %1425 = vdwg.mxu0
        %v1426 = vadd.f32 %v1355, %v1423
        %vm1427 = vcmask 269312
        %1428 = vst.msk [vmem:[%s1354] sm:$0xff] %vm1427, %v1426
      $region64: #{ds_node_edge_readout.2} parent=51 // pred_fallthru
        _
      %p1429 = scmp.lt.s32.totalorder %s23, 1
      %s1430 = scalar_select %p1429, %s23, 1
      %s1431 = smul.addr %s1430, 2
      %s1432 = smul.addr %s1431, 8
      %s1433 = scalar_lea.vmem %s8, %s1432
      // Predicated region
      $region65: #{ds_node_edge_readout.2} parent=51 // pred_check
        %p1434 = pneg %p281
      $region66: #{ds_node_edge_readout.2} parent=51 // pred_check_branch
        %1436 = sbr.rel (%p1434) target = $region68
      $region67: #{ds_node_edge_readout.2} parent=51 // pred_region
        _
      $region68: #{ds_node_edge_readout.2} parent=51 // pred_fallthru
        _
    $region52: #{ds_node_edge_readout.2} parent=5 // pred_fallthru
      _
    %p1437 = scmp.le.s32.totalorder 2, %s14
    // Predicated region
    $region69: #{ds_node_edge_readout.2} parent=5 // pred_check
      %p1438 = pneg %p1437
    $region70: #{ds_node_edge_readout.2} parent=5 // pred_check_branch
      %1440 = sbr.rel (%p1438) target = $region72
    $region71: #{ds_node_edge_readout.2} parent=5 // pred_region
      %s1441 = ssub.s32 %s14, 2
      // Predicated region
      $region73: #{ds_node_edge_readout.2} parent=71 // pred_check
        %p1442 = pneg %p287
      $region74: #{ds_node_edge_readout.2} parent=71 // pred_check_branch
        %1444 = sbr.rel (%p1442) target = $region76
      $region75: #{ds_node_edge_readout.2} parent=71 // pred_region
        %p1445 = scmp.lt.s32.totalorder %s25, 1
        %s1446 = scalar_select %p1445, %s25, 1
        %s1447 = smul.addr %s1446, 2
        %s1448 = smul.addr %s1447, 8
        %s1449 = scalar_lea.vmem %s8, %s1448
      $region76: #{ds_node_edge_readout.2} parent=71 // pred_fallthru
        _
    $region72: #{ds_node_edge_readout.2} parent=5 // pred_fallthru
      _
  $region6: #{ds_node_edge_readout.2} parent=0 // loop_footer
    %s18 = sadd.s32 1, %s14
  $region7: #{ds_node_edge_readout.2} parent=0 // loop_footer_branch
    %13 = sbr.rel target = $region3
  $region8: #{ds_node_edge_readout.2} parent=0 // loop_exit
    _

</llo_original>
